<compile_context>
chip_gen: v7x
topology: tpu7x:2x2x1
jax: 0.10.0
libtpu: 0.0.40
codegen_flags: <defaults>
</compile_context>

<pallas_src>
import functools

import jax
import jax.numpy as jnp
from jax.experimental import pallas as pl
from jax.experimental.pallas import tpu as pltpu

# ---------------- problem sizes (small, consistent with the module) -------------
BATCH_SIZE = 1
NODE_SUM = 128                      # num nodes; channels = batch_size * node_sum
EMBEDDING_DIM = 4                   # number of (conv, LeakyReLU) pairs
N = BATCH_SIZE * NODE_SUM           # feature matrix is [N, N]  (valid for batch_size == 1)
NUM_EDGES = 512
LEAKY_SLOPE = 0.01                  # nn.LeakyReLU default negative_slope

_BF16 = jnp.bfloat16
_F32 = jnp.float32


def _leaky_bf16(f):
    # LeakyReLU(slope in (0,1)) == max(f, slope*f); single VALU max per element.
    return jnp.maximum(f, LEAKY_SLOPE * f).astype(_BF16)


def _pred_tail(fa, fb, pred_ref):
    # prediction_aff = FA_b^T @ FB via transposed-LHS contraction on bf16
    # operands (no f32 materialized transpose on the tail).
    pred_ref[...] = jax.lax.dot_general(
        fa.astype(_BF16), fb.astype(_BF16),
        dimension_numbers=(((0,), (0,)), ((), ())),
        preferred_element_type=_F32)


# ---------------------- Pallas kernels (single program, all VMEM) ---------------
def gnn_geo_kernel_blockdiag(num_layers, adiag_ref, x_ref, w_ref,
                             fa_ref, fb_ref, pred_ref):
    """v6e/v7x path: Adiag = [[A1,0],[0,A2]] bf16 [2N,2N]; activations stacked
    as one [2N,N] value; two matmuls per layer with K=2N filling the MXU."""
    n = x_ref.shape[0]

    # ---- layer 0: FA == FB == X -> shared X @ W computed once -------------------
    xw = jnp.dot(x_ref[...], w_ref[...],
                 preferred_element_type=_F32).astype(_BF16)          # bf16 [N, N]
    stacked = jnp.concatenate([xw, xw], axis=0)                       # bf16 [2N, N]
    f = jnp.dot(adiag_ref[...], stacked,
                preferred_element_type=_F32)                          # f32  [2N, N]

    # ---- remaining layers: LeakyReLU, fused @W, block-diag A-side ---------------
    for _ in range(num_layers - 1):
        act = _leaky_bf16(f)                                          # bf16 [2N, N]
        y = jnp.dot(act, w_ref[...],
                    preferred_element_type=_F32).astype(_BF16)        # bf16 [2N, N]
        f = jnp.dot(adiag_ref[...], y,
                    preferred_element_type=_F32)                      # f32  [2N, N]

    fa = f[:n, :]
    fb = f[n:, :]
    fa_ref[...] = fa
    fb_ref[...] = fb
    _pred_tail(fa, fb, pred_ref)


def gnn_geo_kernel_split(num_layers, a1_ref, a2_ref, x_ref, w_ref,
                         fa_ref, fb_ref, pred_ref):
    """v5e path: K=128 already fills the 128-wide MXU, so the A-side matmuls
    stay separate; the W step is still fused across branches."""
    n = x_ref.shape[0]

    xw = jnp.dot(x_ref[...], w_ref[...],
                 preferred_element_type=_F32).astype(_BF16)
    fa = jnp.dot(a1_ref[...], xw, preferred_element_type=_F32)
    fb = jnp.dot(a2_ref[...], xw, preferred_element_type=_F32)

    for _ in range(num_layers - 1):
        stacked = jnp.concatenate([_leaky_bf16(fa), _leaky_bf16(fb)], axis=0)
        y = jnp.dot(stacked, w_ref[...],
                    preferred_element_type=_F32).astype(_BF16)
        fa = jnp.dot(a1_ref[...], y[:n, :], preferred_element_type=_F32)
        fb = jnp.dot(a2_ref[...], y[n:, :], preferred_element_type=_F32)

    fa_ref[...] = fa
    fb_ref[...] = fb
    _pred_tail(fa, fb, pred_ref)


# ------------------------------ wrapper ------------------------------------------
def _prefer_block_diag():
    """Block-diag (K=256) helps the 2x256x256 MXU of v6e/v7x; on v5e's
    4x128x128 MXU K=128 is already full, so keep the split path there."""
    try:
        kind = jax.devices()[0].device_kind.lower()
    except Exception:  # pragma: no cover - conservative fallback
        return True
    return "v5" not in kind


def gnn_geo_forward(a_hat_1, a_hat_2, feature, weight, *, embedding_dim,
                    block_diag=None):
    n = feature.shape[0]
    num_layers = embedding_dim + 1
    if block_diag is None:
        block_diag = _prefer_block_diag()

    x = feature.astype(_BF16)
    w = weight.astype(_BF16)

    full_spec = pl.BlockSpec((n, n), lambda: (0, 0))
    out_shape = (
        jax.ShapeDtypeStruct((n, n), _F32),   # FA_b
        jax.ShapeDtypeStruct((n, n), _F32),   # FB
        jax.ShapeDtypeStruct((n, n), _F32),   # prediction_aff
    )
    out_specs = (full_spec, full_spec, full_spec)

    if block_diag:
        # Pack the two adjacencies into a block-diagonal bf16 operand once
        # (host/XLA side); exact zeros off-diagonal keep the f32 accumulation
        # bit-identical to the two separate A-side matmuls.
        adiag = jnp.zeros((2 * n, 2 * n), _F32)
        adiag = adiag.at[:n, :n].set(a_hat_1).at[n:, n:].set(a_hat_2)
        adiag = adiag.astype(_BF16)
        kernel = functools.partial(gnn_geo_kernel_blockdiag, num_layers)
        return pl.pallas_call(
            kernel,
            out_shape=out_shape,
            in_specs=[pl.BlockSpec((2 * n, 2 * n), lambda: (0, 0)),
                      full_spec, full_spec],
            out_specs=out_specs,
        )(adiag, x, w)
    else:
        a1 = a_hat_1.astype(_BF16)
        a2 = a_hat_2.astype(_BF16)
        kernel = functools.partial(gnn_geo_kernel_split, num_layers)
        return pl.pallas_call(
            kernel,
            out_shape=out_shape,
            in_specs=[full_spec, full_spec, full_spec, full_spec],
            out_specs=out_specs,
        )(a1, a2, x, w)


# ------------------------------ JAX glue ----------------------------------------
def build_normalized_adj(edge_index, n):
    """Dense A_hat = D^-1/2 (A + I) D^-1/2, matching PyG gcn_norm with unit
    edge weights and self-loops added.  A_hat[dst, src] holds the norm so that
    A_hat @ X aggregates messages src -> dst."""
    # TODO(synk): PyG's add_remaining_self_loops skips nodes that already have a
    # self-loop; this always appends them (host-side only, differs only for
    # random inputs that happen to contain self-loops).
    src = edge_index[0]
    dst = edge_index[1]
    loops = jnp.arange(n, dtype=src.dtype)
    src = jnp.concatenate([src, loops])
    dst = jnp.concatenate([dst, loops])
    ew = jnp.ones(src.shape, _F32)
    deg = jnp.zeros((n,), _F32).at[dst].add(ew)
    dinv = jnp.where(deg > 0, 1.0 / jnp.sqrt(deg), 0.0)
    norm = dinv[src] * ew * dinv[dst]
    a_hat = jnp.zeros((n, n), _F32).at[dst, src].add(norm)
    return a_hat


def glorot_weight(key, fan_in, fan_out):
    # PyG GCNConv uses glorot (Xavier uniform) init on its (in, out) weight.
    limit = jnp.sqrt(6.0 / (fan_in + fan_out))
    return jax.random.uniform(key, (fan_in, fan_out), _F32, -limit, limit)


# ------------------------------ reference ---------------------------------------
def reference_forward(a_hat_1, a_hat_2, feature, weight, *, embedding_dim):
    """Pure-JAX reference replicating the kernel's bf16-operand / f32-accum
    rounding pattern exactly, so tolerances stay tight and meaningful."""
    a1 = a_hat_1.astype(_BF16)
    a2 = a_hat_2.astype(_BF16)
    w = weight.astype(_BF16)
    x = feature.astype(_BF16)

    xw = jnp.dot(x, w, preferred_element_type=_F32).astype(_BF16)
    fa = jnp.dot(a1, xw, preferred_element_type=_F32)
    fb = jnp.dot(a2, xw, preferred_element_type=_F32)
    for _ in range(embedding_dim):
        ya = jnp.dot(_leaky_bf16(fa), w, preferred_element_type=_F32).astype(_BF16)
        yb = jnp.dot(_leaky_bf16(fb), w, preferred_element_type=_F32).astype(_BF16)
        fa = jnp.dot(a1, ya, preferred_element_type=_F32)
        fb = jnp.dot(a2, yb, preferred_element_type=_F32)
    pred = jax.lax.dot_general(
        fa.astype(_BF16), fb.astype(_BF16),
        dimension_numbers=(((0,), (0,)), ((), ())),
        preferred_element_type=_F32)
    return fa, fb, pred


# --------------------------------- main ------------------------------------------
if __name__ == "__main__":
    key = jax.random.PRNGKey(0)
    k_e1, k_e2, k_feat, k_w = jax.random.split(key, 4)

    edge_index_1 = jax.random.randint(k_e1, (2, NUM_EDGES), 0, NODE_SUM, jnp.int32)
    edge_index_2 = jax.random.randint(k_e2, (2, NUM_EDGES), 0, NODE_SUM, jnp.int32)
    feature = jax.random.normal(k_feat, (NODE_SUM, N), _F32)
    weight = glorot_weight(k_w, N, N)          # shared self.convolution weight

    # NOTE: only self.convolution / self.leakyrelu are reachable from forward();
    # convolution_1..6, Linear1 (Bilinear), Linear2 are dead there and not
    # materialized.  The [N, N] feature layout assumes batch_size == 1.

    a_hat_1 = build_normalized_adj(edge_index_1, NODE_SUM)
    a_hat_2 = build_normalized_adj(edge_index_2, NODE_SUM)

    fa_b, fb, pred = gnn_geo_forward(a_hat_1, a_hat_2, feature, weight,
                                     embedding_dim=EMBEDDING_DIM)
    jax.block_until_ready((fa_b, fb, pred))

    fa_ref, fb_ref, pred_ref = reference_forward(a_hat_1, a_hat_2, feature, weight,
                                                 embedding_dim=EMBEDDING_DIM)
    assert jnp.allclose(fa_b, fa_ref, atol=2e-2, rtol=2e-2)
    assert jnp.allclose(fb, fb_ref, atol=2e-2, rtol=2e-2)
    assert jnp.allclose(pred, pred_ref, atol=2e-2, rtol=2e-2)

    print("KERNEL_OK")
</pallas_src>

<mosaic_0001>
module attributes {stable_mosaic.version = 11 : i64} {
  func.func @gnn_geo_kernel_blockdiag(%arg0: memref<256x256xbf16, #tpu.memory_space<vmem>>, %arg1: memref<128x128xbf16, #tpu.memory_space<vmem>>, %arg2: memref<128x128xbf16, #tpu.memory_space<vmem>>, %arg3: memref<128x128xf32, #tpu.memory_space<vmem>>, %arg4: memref<128x128xf32, #tpu.memory_space<vmem>>, %arg5: memref<128x128xf32, #tpu.memory_space<vmem>>) attributes {dimension_semantics = [], scalar_prefetch = 0 : i64, scratch_operands = 0 : i64, tpu.core_type = #tpu.core_type<tc>} {
    %c0 = arith.constant 0 : index
    %c0_0 = arith.constant 0 : index
    %0 = vector.load %arg1[%c0, %c0_0] : memref<128x128xbf16, #tpu.memory_space<vmem>>, vector<128x128xbf16>
    %c0_1 = arith.constant 0 : index
    %c0_2 = arith.constant 0 : index
    %1 = vector.load %arg2[%c0_1, %c0_2] : memref<128x128xbf16, #tpu.memory_space<vmem>>, vector<128x128xbf16>
    %cst = arith.constant dense<0.000000e+00> : vector<128x128xf32>
    %2 = tpu.matmul %0, %1, %cst {dimension_numbers = #tpu.dot_dimension_numbers<[1], [0], [0], [1], [0, 0, 1, 1], [], []>} : vector<128x128xbf16>, vector<128x128xbf16>, vector<128x128xf32> -> vector<128x128xf32>
    %3 = arith.truncf %2 : vector<128x128xf32> to vector<128x128xbf16>
    %4 = tpu.concatenate %3, %3 in 0 : vector<128x128xbf16>, vector<128x128xbf16> -> vector<256x128xbf16>
    %c0_3 = arith.constant 0 : index
    %c0_4 = arith.constant 0 : index
    %5 = vector.load %arg0[%c0_3, %c0_4] : memref<256x256xbf16, #tpu.memory_space<vmem>>, vector<256x256xbf16>
    %cst_5 = arith.constant dense<0.000000e+00> : vector<256x128xf32>
    %6 = tpu.matmul %5, %4, %cst_5 {dimension_numbers = #tpu.dot_dimension_numbers<[1], [0], [0], [1], [0, 0, 1, 1], [], []>} : vector<256x256xbf16>, vector<256x128xbf16>, vector<256x128xf32> -> vector<256x128xf32>
    %cst_6 = arith.constant 0.00999999977 : f32
    %7 = vector.broadcast %cst_6 : f32 to vector<256x128xf32>
    %8 = arith.mulf %7, %6 : vector<256x128xf32>
    %9 = arith.maximumf %6, %8 : vector<256x128xf32>
    %10 = arith.truncf %9 : vector<256x128xf32> to vector<256x128xbf16>
    %c0_7 = arith.constant 0 : index
    %c0_8 = arith.constant 0 : index
    %11 = vector.load %arg2[%c0_7, %c0_8] : memref<128x128xbf16, #tpu.memory_space<vmem>>, vector<128x128xbf16>
    %cst_9 = arith.constant dense<0.000000e+00> : vector<256x128xf32>
    %12 = tpu.matmul %10, %11, %cst_9 {dimension_numbers = #tpu.dot_dimension_numbers<[1], [0], [0], [1], [0, 0, 1, 1], [], []>} : vector<256x128xbf16>, vector<128x128xbf16>, vector<256x128xf32> -> vector<256x128xf32>
    %13 = arith.truncf %12 : vector<256x128xf32> to vector<256x128xbf16>
    %c0_10 = arith.constant 0 : index
    %c0_11 = arith.constant 0 : index
    %14 = vector.load %arg0[%c0_10, %c0_11] : memref<256x256xbf16, #tpu.memory_space<vmem>>, vector<256x256xbf16>
    %cst_12 = arith.constant dense<0.000000e+00> : vector<256x128xf32>
    %15 = tpu.matmul %14, %13, %cst_12 {dimension_numbers = #tpu.dot_dimension_numbers<[1], [0], [0], [1], [0, 0, 1, 1], [], []>} : vector<256x256xbf16>, vector<256x128xbf16>, vector<256x128xf32> -> vector<256x128xf32>
    %cst_13 = arith.constant 0.00999999977 : f32
    %16 = vector.broadcast %cst_13 : f32 to vector<256x128xf32>
    %17 = arith.mulf %16, %15 : vector<256x128xf32>
    %18 = arith.maximumf %15, %17 : vector<256x128xf32>
    %19 = arith.truncf %18 : vector<256x128xf32> to vector<256x128xbf16>
    %c0_14 = arith.constant 0 : index
    %c0_15 = arith.constant 0 : index
    %20 = vector.load %arg2[%c0_14, %c0_15] : memref<128x128xbf16, #tpu.memory_space<vmem>>, vector<128x128xbf16>
    %cst_16 = arith.constant dense<0.000000e+00> : vector<256x128xf32>
    %21 = tpu.matmul %19, %20, %cst_16 {dimension_numbers = #tpu.dot_dimension_numbers<[1], [0], [0], [1], [0, 0, 1, 1], [], []>} : vector<256x128xbf16>, vector<128x128xbf16>, vector<256x128xf32> -> vector<256x128xf32>
    %22 = arith.truncf %21 : vector<256x128xf32> to vector<256x128xbf16>
    %c0_17 = arith.constant 0 : index
    %c0_18 = arith.constant 0 : index
    %23 = vector.load %arg0[%c0_17, %c0_18] : memref<256x256xbf16, #tpu.memory_space<vmem>>, vector<256x256xbf16>
    %cst_19 = arith.constant dense<0.000000e+00> : vector<256x128xf32>
    %24 = tpu.matmul %23, %22, %cst_19 {dimension_numbers = #tpu.dot_dimension_numbers<[1], [0], [0], [1], [0, 0, 1, 1], [], []>} : vector<256x256xbf16>, vector<256x128xbf16>, vector<256x128xf32> -> vector<256x128xf32>
    %cst_20 = arith.constant 0.00999999977 : f32
    %25 = vector.broadcast %cst_20 : f32 to vector<256x128xf32>
    %26 = arith.mulf %25, %24 : vector<256x128xf32>
    %27 = arith.maximumf %24, %26 : vector<256x128xf32>
    %28 = arith.truncf %27 : vector<256x128xf32> to vector<256x128xbf16>
    %c0_21 = arith.constant 0 : index
    %c0_22 = arith.constant 0 : index
    %29 = vector.load %arg2[%c0_21, %c0_22] : memref<128x128xbf16, #tpu.memory_space<vmem>>, vector<128x128xbf16>
    %cst_23 = arith.constant dense<0.000000e+00> : vector<256x128xf32>
    %30 = tpu.matmul %28, %29, %cst_23 {dimension_numbers = #tpu.dot_dimension_numbers<[1], [0], [0], [1], [0, 0, 1, 1], [], []>} : vector<256x128xbf16>, vector<128x128xbf16>, vector<256x128xf32> -> vector<256x128xf32>
    %31 = arith.truncf %30 : vector<256x128xf32> to vector<256x128xbf16>
    %c0_24 = arith.constant 0 : index
    %c0_25 = arith.constant 0 : index
    %32 = vector.load %arg0[%c0_24, %c0_25] : memref<256x256xbf16, #tpu.memory_space<vmem>>, vector<256x256xbf16>
    %cst_26 = arith.constant dense<0.000000e+00> : vector<256x128xf32>
    %33 = tpu.matmul %32, %31, %cst_26 {dimension_numbers = #tpu.dot_dimension_numbers<[1], [0], [0], [1], [0, 0, 1, 1], [], []>} : vector<256x256xbf16>, vector<256x128xbf16>, vector<256x128xf32> -> vector<256x128xf32>
    %cst_27 = arith.constant 0.00999999977 : f32
    %34 = vector.broadcast %cst_27 : f32 to vector<256x128xf32>
    %35 = arith.mulf %34, %33 : vector<256x128xf32>
    %36 = arith.maximumf %33, %35 : vector<256x128xf32>
    %37 = arith.truncf %36 : vector<256x128xf32> to vector<256x128xbf16>
    %c0_28 = arith.constant 0 : index
    %c0_29 = arith.constant 0 : index
    %38 = vector.load %arg2[%c0_28, %c0_29] : memref<128x128xbf16, #tpu.memory_space<vmem>>, vector<128x128xbf16>
    %cst_30 = arith.constant dense<0.000000e+00> : vector<256x128xf32>
    %39 = tpu.matmul %37, %38, %cst_30 {dimension_numbers = #tpu.dot_dimension_numbers<[1], [0], [0], [1], [0, 0, 1, 1], [], []>} : vector<256x128xbf16>, vector<128x128xbf16>, vector<256x128xf32> -> vector<256x128xf32>
    %40 = arith.truncf %39 : vector<256x128xf32> to vector<256x128xbf16>
    %c0_31 = arith.constant 0 : index
    %c0_32 = arith.constant 0 : index
    %41 = vector.load %arg0[%c0_31, %c0_32] : memref<256x256xbf16, #tpu.memory_space<vmem>>, vector<256x256xbf16>
    %cst_33 = arith.constant dense<0.000000e+00> : vector<256x128xf32>
    %42 = tpu.matmul %41, %40, %cst_33 {dimension_numbers = #tpu.dot_dimension_numbers<[1], [0], [0], [1], [0, 0, 1, 1], [], []>} : vector<256x256xbf16>, vector<256x128xbf16>, vector<256x128xf32> -> vector<256x128xf32>
    %43 = vector.extract_strided_slice %42 {offsets = [0, 0], sizes = [128, 128], strides = [1, 1]} : vector<256x128xf32> to vector<128x128xf32>
    %44 = vector.extract_strided_slice %42 {offsets = [128, 0], sizes = [128, 128], strides = [1, 1]} : vector<256x128xf32> to vector<128x128xf32>
    %c0_34 = arith.constant 0 : index
    %c0_35 = arith.constant 0 : index
    %45 = vector.load %arg3[%c0_34, %c0_35] : memref<128x128xf32, #tpu.memory_space<vmem>>, vector<128x128xf32>
    tpu.vector_store %arg3[%c0_34, %c0_35], %43 {strides = array<i32>} : memref<128x128xf32, #tpu.memory_space<vmem>>, vector<128x128xf32>,
    %c0_36 = arith.constant 0 : index
    %c0_37 = arith.constant 0 : index
    %46 = vector.load %arg4[%c0_36, %c0_37] : memref<128x128xf32, #tpu.memory_space<vmem>>, vector<128x128xf32>
    tpu.vector_store %arg4[%c0_36, %c0_37], %44 {strides = array<i32>} : memref<128x128xf32, #tpu.memory_space<vmem>>, vector<128x128xf32>,
    %47 = arith.truncf %43 : vector<128x128xf32> to vector<128x128xbf16>
    %48 = arith.truncf %44 : vector<128x128xf32> to vector<128x128xbf16>
    %cst_38 = arith.constant dense<0.000000e+00> : vector<128x128xf32>
    %49 = tpu.matmul %47, %48, %cst_38 {dimension_numbers = #tpu.dot_dimension_numbers<[0], [0], [1], [1], [0, 1, 1, 1], [], []>} : vector<128x128xbf16>, vector<128x128xbf16>, vector<128x128xf32> -> vector<128x128xf32>
    %c0_39 = arith.constant 0 : index
    %c0_40 = arith.constant 0 : index
    %50 = vector.load %arg5[%c0_39, %c0_40] : memref<128x128xf32, #tpu.memory_space<vmem>>, vector<128x128xf32>
    tpu.vector_store %arg5[%c0_39, %c0_40], %49 {strides = array<i32>} : memref<128x128xf32, #tpu.memory_space<vmem>>, vector<128x128xf32>,
    return
  }
}

</mosaic_0001>

<llo_original>
// kernel: tpu_custom_call.1
$region0: #{tpu_custom_call.1}
  #allocation0 [shape = 'u32[]', space=smem, size = 0x4, offset = 0x4, fixed_abs, tag = 'smem constant byte address 0x4 - core index']
  #allocation1 [shape = 'u32[144,128]{1,0:T(1,128)}', space=vmem, size = 0x12000, scoped, tag = 'internal scratch']
  %s0 = inlined_call_operand.hbm [shape: bf16[256,256], index: 0, kind: input, shape index: {}]
  %s1 = inlined_call_operand.hbm [shape: bf16[128,128], index: 1, kind: input, shape index: {}]
  %s2 = inlined_call_operand.hbm [shape: bf16[128,128], index: 2, kind: input, shape index: {}]
  %s3 = inlined_call_operand.hbm [shape: f32[128,128], index: 3, kind: output, shape index: {0}]
  %s4 = inlined_call_operand.hbm [shape: f32[128,128], index: 4, kind: output, shape index: {1}]
  %s5 = inlined_call_operand.hbm [shape: f32[128,128], index: 5, kind: output, shape index: {2}]
  %6 = xla_tuple %s3, %s4, %s5
  %s7 = sld [smem:[#allocation0]]
  $region50: #{tpu_custom_call.1} parent=0
    _
  %s9 = ssub.s32 1, %s7
  %s10 = scalar_select 0, %s9, %s7
  $region1: #{tpu_custom_call.1} parent=0
    #allocation2 [shape = 'u8[131072]{0}', space=vmem, size = 0x20000, scoped, tag = 'input window, operand 0, single buffered']
    #allocation3 [shape = 's32[1]{0}', space=sflag, size = 0x4, scoped, tag = 'scoped memory for tpu_custom_call.1']
    #allocation4 [shape = 's32[1]{0}', space=sflag, size = 0x4, scoped, tag = 'scoped memory for tpu_custom_call.1']
    #allocation5 [shape = 'u8[32768]{0}', space=vmem, size = 0x8000, scoped, tag = 'input window, operand 1, single buffered']
    #allocation6 [shape = 's32[1]{0}', space=sflag, size = 0x4, scoped, tag = 'scoped memory for tpu_custom_call.1']
    #allocation7 [shape = 'u8[32768]{0}', space=vmem, size = 0x8000, scoped, tag = 'input window, operand 2, single buffered']
    #allocation8 [shape = 'u8[65536]{0}', space=vmem, size = 0x10000, scoped, tag = 'output window, operand 0, single buffered']
    #allocation9 [shape = 'u8[65536]{0}', space=vmem, size = 0x10000, scoped, tag = 'output window, operand 1, single buffered']
    #allocation10 [shape = 's32[1]{0}', space=sflag, size = 0x4, scoped, tag = 'scoped memory for tpu_custom_call.1']
    #allocation11 [shape = 'u8[65536]{0}', space=vmem, size = 0x10000, scoped, tag = 'output window, operand 2, single buffered']
    %11 = vsyncpa [#allocation3], 0
    %12 = vsyncpa [#allocation6], 0
    %13 = vsyncpa [#allocation4], 0
    %14 = vsyncpa [#allocation10], 0
    // Predicated region
    $region2: #{tpu_custom_call.1} parent=1 // pred_check
      _
    $region3: #{tpu_custom_call.1} parent=1 // pred_check_branch
      %16 = sbr.rel (0) target = $region5
    $region4: #{tpu_custom_call.1} parent=1 // pred_region
      %s18 = ssub.s32 4096, 4096
      %19 = vsyncadd [#allocation3], %s18
      %s20 = sshll.u32 [#allocation2], 4
      %s21 = int_to_ptr.vmem [resolvable:$true] %s20
      %26 = dma.hbm_to_vmem [thread:$0]  %s0, 4096, %s21, [#allocation3], 128, 128, 8
    $region5: #{tpu_custom_call.1} parent=1 // pred_fallthru
      _
    // Predicated region
    $region6: #{tpu_custom_call.1} parent=1 // pred_check
      _
    $region7: #{tpu_custom_call.1} parent=1 // pred_check_branch
      %28 = sbr.rel (0) target = $region9
    $region8: #{tpu_custom_call.1} parent=1 // pred_region
      %s30 = ssub.s32 1024, 1024
      %31 = vsyncadd [#allocation6], %s30
      %s32 = sshll.u32 [#allocation5], 4
      %s33 = int_to_ptr.vmem [resolvable:$true] %s32
      %38 = dma.hbm_to_vmem [thread:$0]  %s1, 1024, %s33, [#allocation6], 64, 64, 4
    $region9: #{tpu_custom_call.1} parent=1 // pred_fallthru
      _
    // Predicated region
    $region10: #{tpu_custom_call.1} parent=1 // pred_check
      _
    $region11: #{tpu_custom_call.1} parent=1 // pred_check_branch
      %40 = sbr.rel (0) target = $region13
    $region12: #{tpu_custom_call.1} parent=1 // pred_region
      %s42 = ssub.s32 1024, 1024
      %43 = vsyncadd [#allocation6], %s42
      %s44 = sshll.u32 [#allocation7], 4
      %s45 = int_to_ptr.vmem [resolvable:$true] %s44
      %50 = dma.hbm_to_vmem [thread:$0]  %s2, 1024, %s45, [#allocation6], 64, 64, 4
    $region13: #{tpu_custom_call.1} parent=1 // pred_fallthru
      _
    // Predicated region
    $region14: #{tpu_custom_call.1} parent=1 // pred_check
      _
    $region15: #{tpu_custom_call.1} parent=1 // pred_check_branch
      %52 = sbr.rel (0) target = $region17
    $region16: #{tpu_custom_call.1} parent=1 // pred_region
      %53 = dma.done [#allocation3], 4096
    $region17: #{tpu_custom_call.1} parent=1 // pred_fallthru
      _
    // Predicated region
    $region18: #{tpu_custom_call.1} parent=1 // pred_check
      _
    $region19: #{tpu_custom_call.1} parent=1 // pred_check_branch
      %55 = sbr.rel (0) target = $region21
    $region20: #{tpu_custom_call.1} parent=1 // pred_region
      %56 = dma.done [#allocation6], 1024
    $region21: #{tpu_custom_call.1} parent=1 // pred_fallthru
      _
    // Predicated region
    $region22: #{tpu_custom_call.1} parent=1 // pred_check
      _
    $region23: #{tpu_custom_call.1} parent=1 // pred_check_branch
      %58 = sbr.rel (0) target = $region25
    $region24: #{tpu_custom_call.1} parent=1 // pred_region
      %59 = dma.done [#allocation6], 1024
    $region25: #{tpu_custom_call.1} parent=1 // pred_fallthru
      _
    %v61 = vld [vmem:[#allocation5] sm:$0xf]
    %v62 = vld [vmem:[#allocation5 + $0x4] sm:$0xf]
    %v63 = vld [vmem:[#allocation5 + $0x8] sm:$0xf]
    %v64 = vld [vmem:[#allocation5 + $0xc] sm:$0xf]
    %v65 = vld [vmem:[#allocation5 + $0x10] sm:$0xf]
    %v66 = vld [vmem:[#allocation5 + $0x14] sm:$0xf]
    %v67 = vld [vmem:[#allocation5 + $0x18] sm:$0xf]
    %v68 = vld [vmem:[#allocation5 + $0x1c] sm:$0xf]
    %v69 = vld [vmem:[#allocation5 + $0x20] sm:$0xf]
    %v70 = vld [vmem:[#allocation5 + $0x24] sm:$0xf]
    %v71 = vld [vmem:[#allocation5 + $0x28] sm:$0xf]
    %v72 = vld [vmem:[#allocation5 + $0x2c] sm:$0xf]
    %v73 = vld [vmem:[#allocation5 + $0x30] sm:$0xf]
    %v74 = vld [vmem:[#allocation5 + $0x34] sm:$0xf]
    %v75 = vld [vmem:[#allocation5 + $0x38] sm:$0xf]
    %v76 = vld [vmem:[#allocation5 + $0x3c] sm:$0xf]
    %v77 = vld [vmem:[#allocation7] sm:$0xf]
    %v78 = vld [vmem:[#allocation7 + $0x4] sm:$0xf]
    %v79 = vld [vmem:[#allocation7 + $0x8] sm:$0xf]
    %v80 = vld [vmem:[#allocation7 + $0xc] sm:$0xf]
    %v81 = vld [vmem:[#allocation7 + $0x10] sm:$0xf]
    %v82 = vld [vmem:[#allocation7 + $0x14] sm:$0xf]
    %v83 = vld [vmem:[#allocation7 + $0x18] sm:$0xf]
    %v84 = vld [vmem:[#allocation7 + $0x1c] sm:$0xf]
    %v85 = vld [vmem:[#allocation7 + $0x20] sm:$0xf]
    %v86 = vld [vmem:[#allocation7 + $0x24] sm:$0xf]
    %v87 = vld [vmem:[#allocation7 + $0x28] sm:$0xf]
    %v88 = vld [vmem:[#allocation7 + $0x2c] sm:$0xf]
    %v89 = vld [vmem:[#allocation7 + $0x30] sm:$0xf]
    %v90 = vld [vmem:[#allocation7 + $0x34] sm:$0xf]
    %v91 = vld [vmem:[#allocation7 + $0x38] sm:$0xf]
    %v92 = vld [vmem:[#allocation7 + $0x3c] sm:$0xf]
    %v109 = vunpack.c.l.b16 %v61
    %v110 = vunpack.c.l.b16 %v62
    %v111 = vunpack.c.l.b16 %v63
    %v112 = vunpack.c.l.b16 %v64
    %v113 = vunpack.c.l.b16 %v65
    %v114 = vunpack.c.l.b16 %v66
    %v115 = vunpack.c.l.b16 %v67
    %v116 = vunpack.c.l.b16 %v68
    %v117 = vunpack.c.l.b16 %v69
    %v118 = vunpack.c.l.b16 %v70
    %v119 = vunpack.c.l.b16 %v71
    %v120 = vunpack.c.l.b16 %v72
    %v121 = vunpack.c.l.b16 %v73
    %v122 = vunpack.c.l.b16 %v74
    %v123 = vunpack.c.l.b16 %v75
    %v124 = vunpack.c.l.b16 %v76
    %v125 = vpack.c.b16 %v110, %v109
    %v126 = vpack.c.b16 %v112, %v111
    %v127 = vpack.c.b16 %v114, %v113
    %v128 = vpack.c.b16 %v116, %v115
    %v129 = vpack.c.b16 %v118, %v117
    %v130 = vpack.c.b16 %v120, %v119
    %v131 = vpack.c.b16 %v122, %v121
    %v132 = vpack.c.b16 %v124, %v123
    %v157 = vunpack.c.l.b16 %v77
    %v158 = vunpack.c.l.b16 %v78
    %v159 = vunpack.c.l.b16 %v79
    %v160 = vunpack.c.l.b16 %v80
    %v161 = vunpack.c.l.b16 %v81
    %v162 = vunpack.c.l.b16 %v82
    %v163 = vunpack.c.l.b16 %v83
    %v164 = vunpack.c.l.b16 %v84
    %v165 = vunpack.c.l.b16 %v85
    %v166 = vunpack.c.l.b16 %v86
    %v167 = vunpack.c.l.b16 %v87
    %v168 = vunpack.c.l.b16 %v88
    %v169 = vunpack.c.l.b16 %v89
    %v170 = vunpack.c.l.b16 %v90
    %v171 = vunpack.c.l.b16 %v91
    %v172 = vunpack.c.l.b16 %v92
    %v173 = vpack.c.b16 %v158, %v157
    %v174 = vpack.c.b16 %v160, %v159
    %v175 = vpack.c.b16 %v162, %v161
    %v176 = vpack.c.b16 %v164, %v163
    %v177 = vpack.c.b16 %v166, %v165
    %v178 = vpack.c.b16 %v168, %v167
    %v179 = vpack.c.b16 %v170, %v169
    %v180 = vpack.c.b16 %v172, %v171
    %189 = vmatprep.subr.bf16.mxu0 0
    %190 = vmatpush1.bf16.msra.mxu0 %v173
    %191 = vmatprep.subr.bf16.mxu0 0
    %192 = vmatpush1.bf16.msra.mxu0 %v174
    %193 = vmatprep.subr.bf16.mxu0 0
    %194 = vmatpush1.bf16.msra.mxu0 %v175
    %195 = vmatprep.subr.bf16.mxu0 0
    %196 = vmatpush1.bf16.msra.mxu0 %v176
    %197 = vmatprep.subr.bf16.mxu0 0
    %198 = vmatpush1.bf16.msra.mxu0 %v177
    %199 = vmatprep.subr.bf16.mxu0 0
    %200 = vmatpush1.bf16.msra.mxu0 %v178
    %201 = vmatprep.subr.bf16.mxu0 0
    %202 = vmatpush1.bf16.msra.mxu0 %v179
    %203 = vmatprep.subr.bf16.mxu0 0
    %204 = vmatpush1.bf16.msra.mxu0 %v180
    %205 = vmatprep.subr.bf16.mxu0 0
    %206 = vmatpush1.bf16.msra.mxu0 0
    %207 = vmatprep.subr.bf16.mxu0 0
    %208 = vmatpush1.bf16.msra.mxu0 0
    %209 = vmatprep.subr.bf16.mxu0 0
    %210 = vmatpush1.bf16.msra.mxu0 0
    %211 = vmatprep.subr.bf16.mxu0 0
    %212 = vmatpush1.bf16.msra.mxu0 0
    %213 = vmatprep.subr.bf16.mxu0 0
    %214 = vmatpush1.bf16.msra.mxu0 0
    %215 = vmatprep.subr.bf16.mxu0 0
    %216 = vmatpush1.bf16.msra.mxu0 0
    %217 = vmatprep.subr.bf16.mxu0 0
    %218 = vmatpush1.bf16.msra.mxu0 0
    %219 = vmatprep.subr.bf16.mxu0 0
    %220 = vmatpush1.bf16.msra.mxu0 0
    %221 = vmatprep.mubr.bf16.mxu0 0
    %222 = vmatmul.mubr.bf16.gmra.mrb[0].mxu0 %v125
    %v223 = vpop.f32.mrb[0].mxu0
    %v224 = vadd.f32 0.0, %v223
    %v225 = vpop.f32.mrb[0].mxu0
    %v226 = vpop.f32.mrb[0].mxu0
    %v227 = vadd.f32 0.0, %v226
    %v228 = vpop.f32.mrb[0].mxu0
    %229 = vmatprep.mubr.bf16.mxu0 0
    %230 = vmatmul.mubr.bf16.gmra.mrb[0].mxu0 %v126
    %v231 = vpop.f32.mrb[0].mxu0
    %v232 = vadd.f32 0.0, %v231
    %v233 = vpop.f32.mrb[0].mxu0
    %v234 = vpop.f32.mrb[0].mxu0
    %v235 = vadd.f32 0.0, %v234
    %v236 = vpop.f32.mrb[0].mxu0
    %237 = vmatprep.mubr.bf16.mxu0 0
    %238 = vmatmul.mubr.bf16.gmra.mrb[0].mxu0 %v127
    %v239 = vpop.f32.mrb[0].mxu0
    %v240 = vadd.f32 0.0, %v239
    %v241 = vpop.f32.mrb[0].mxu0
    %v242 = vpop.f32.mrb[0].mxu0
    %v243 = vadd.f32 0.0, %v242
    %v244 = vpop.f32.mrb[0].mxu0
    %245 = vmatprep.mubr.bf16.mxu0 0
    %246 = vmatmul.mubr.bf16.gmra.mrb[0].mxu0 %v128
    %v247 = vpop.f32.mrb[0].mxu0
    %v248 = vadd.f32 0.0, %v247
    %v249 = vpop.f32.mrb[0].mxu0
    %v250 = vpop.f32.mrb[0].mxu0
    %v251 = vadd.f32 0.0, %v250
    %v252 = vpop.f32.mrb[0].mxu0
    %253 = vmatprep.mubr.bf16.mxu0 0
    %254 = vmatmul.mubr.bf16.gmra.mrb[0].mxu0 %v129
    %v255 = vpop.f32.mrb[0].mxu0
    %v256 = vadd.f32 0.0, %v255
    %v257 = vpop.f32.mrb[0].mxu0
    %v258 = vpop.f32.mrb[0].mxu0
    %v259 = vadd.f32 0.0, %v258
    %v260 = vpop.f32.mrb[0].mxu0
    %261 = vmatprep.mubr.bf16.mxu0 0
    %262 = vmatmul.mubr.bf16.gmra.mrb[0].mxu0 %v130
    %v263 = vpop.f32.mrb[0].mxu0
    %v264 = vadd.f32 0.0, %v263
    %v265 = vpop.f32.mrb[0].mxu0
    %v266 = vpop.f32.mrb[0].mxu0
    %v267 = vadd.f32 0.0, %v266
    %v268 = vpop.f32.mrb[0].mxu0
    %269 = vmatprep.mubr.bf16.mxu0 0
    %270 = vmatmul.mubr.bf16.gmra.mrb[0].mxu0 %v131
    %v271 = vpop.f32.mrb[0].mxu0
    %v272 = vadd.f32 0.0, %v271
    %v273 = vpop.f32.mrb[0].mxu0
    %v274 = vpop.f32.mrb[0].mxu0
    %v275 = vadd.f32 0.0, %v274
    %v276 = vpop.f32.mrb[0].mxu0
    %277 = vmatprep.mubr.bf16.mxu0 0
    %278 = vmatmul.mubr.bf16.gmra.mrb[0].mxu0 %v132
    %v279 = vpop.f32.mrb[0].mxu0
    %v280 = vadd.f32 0.0, %v279
    %v281 = vpop.f32.mrb[0].mxu0
    %v282 = vpop.f32.mrb[0].mxu0
    %v283 = vadd.f32 0.0, %v282
    %v284 = vpop.f32.mrb[0].mxu0
    %285 = vdwg.mxu0
    %v286 = vpack.c.bf16 %v227, %v224
    %v287 = vpack.c.bf16 %v235, %v232
    %v288 = vpack.c.bf16 %v243, %v240
    %v289 = vpack.c.bf16 %v251, %v248
    %v290 = vpack.c.bf16 %v259, %v256
    %v291 = vpack.c.bf16 %v267, %v264
    %v292 = vpack.c.bf16 %v275, %v272
    %v293 = vpack.c.bf16 %v283, %v280
    %v294 = vld [vmem:[#allocation2] sm:$0xff]
    %v295 = vld [vmem:[#allocation2 + $0x8] sm:$0xff]
    %v296 = vld [vmem:[#allocation2 + $0x10] sm:$0xff]
    %v297 = vld [vmem:[#allocation2 + $0x18] sm:$0xff]
    %v298 = vld [vmem:[#allocation2 + $0x20] sm:$0xff]
    %v299 = vld [vmem:[#allocation2 + $0x28] sm:$0xff]
    %v300 = vld [vmem:[#allocation2 + $0x30] sm:$0xff]
    %v301 = vld [vmem:[#allocation2 + $0x38] sm:$0xff]
    %v302 = vld [vmem:[#allocation2 + $0x40] sm:$0xff]
    %v303 = vld [vmem:[#allocation2 + $0x48] sm:$0xff]
    %v304 = vld [vmem:[#allocation2 + $0x50] sm:$0xff]
    %v305 = vld [vmem:[#allocation2 + $0x58] sm:$0xff]
    %v306 = vld [vmem:[#allocation2 + $0x60] sm:$0xff]
    %v307 = vld [vmem:[#allocation2 + $0x68] sm:$0xff]
    %v308 = vld [vmem:[#allocation2 + $0x70] sm:$0xff]
    %v309 = vld [vmem:[#allocation2 + $0x78] sm:$0xff]
    %v310 = vld [vmem:[#allocation2 + $0x80] sm:$0xff]
    %v311 = vld [vmem:[#allocation2 + $0x88] sm:$0xff]
    %v312 = vld [vmem:[#allocation2 + $0x90] sm:$0xff]
    %v313 = vld [vmem:[#allocation2 + $0x98] sm:$0xff]
    %v314 = vld [vmem:[#allocation2 + $0xa0] sm:$0xff]
    %v315 = vld [vmem:[#allocation2 + $0xa8] sm:$0xff]
    %v316 = vld [vmem:[#allocation2 + $0xb0] sm:$0xff]
    %v317 = vld [vmem:[#allocation2 + $0xb8] sm:$0xff]
    %v318 = vld [vmem:[#allocation2 + $0xc0] sm:$0xff]
    %v319 = vld [vmem:[#allocation2 + $0xc8] sm:$0xff]
    %v320 = vld [vmem:[#allocation2 + $0xd0] sm:$0xff]
    %v321 = vld [vmem:[#allocation2 + $0xd8] sm:$0xff]
    %v322 = vld [vmem:[#allocation2 + $0xe0] sm:$0xff]
    %v323 = vld [vmem:[#allocation2 + $0xe8] sm:$0xff]
    %v324 = vld [vmem:[#allocation2 + $0xf0] sm:$0xff]
    %v325 = vld [vmem:[#allocation2 + $0xf8] sm:$0xff]
    %v358 = vunpack.c.l.b16 %v294
    %v359 = vunpack.c.h.b16 %v294
    %v360 = vunpack.c.l.b16 %v295
    %v361 = vunpack.c.h.b16 %v295
    %v362 = vunpack.c.l.b16 %v296
    %v363 = vunpack.c.h.b16 %v296
    %v364 = vunpack.c.l.b16 %v297
    %v365 = vunpack.c.h.b16 %v297
    %v366 = vunpack.c.l.b16 %v298
    %v367 = vunpack.c.h.b16 %v298
    %v368 = vunpack.c.l.b16 %v299
    %v369 = vunpack.c.h.b16 %v299
    %v370 = vunpack.c.l.b16 %v300
    %v371 = vunpack.c.h.b16 %v300
    %v372 = vunpack.c.l.b16 %v301
    %v373 = vunpack.c.h.b16 %v301
    %v374 = vunpack.c.l.b16 %v302
    %v375 = vunpack.c.h.b16 %v302
    %v376 = vunpack.c.l.b16 %v303
    %v377 = vunpack.c.h.b16 %v303
    %v378 = vunpack.c.l.b16 %v304
    %v379 = vunpack.c.h.b16 %v304
    %v380 = vunpack.c.l.b16 %v305
    %v381 = vunpack.c.h.b16 %v305
    %v382 = vunpack.c.l.b16 %v306
    %v383 = vunpack.c.h.b16 %v306
    %v384 = vunpack.c.l.b16 %v307
    %v385 = vunpack.c.h.b16 %v307
    %v386 = vunpack.c.l.b16 %v308
    %v387 = vunpack.c.h.b16 %v308
    %v388 = vunpack.c.l.b16 %v309
    %v389 = vunpack.c.h.b16 %v309
    %v390 = vunpack.c.l.b16 %v310
    %v391 = vunpack.c.h.b16 %v310
    %v392 = vunpack.c.l.b16 %v311
    %v393 = vunpack.c.h.b16 %v311
    %v394 = vunpack.c.l.b16 %v312
    %v395 = vunpack.c.h.b16 %v312
    %v396 = vunpack.c.l.b16 %v313
    %v397 = vunpack.c.h.b16 %v313
    %v398 = vunpack.c.l.b16 %v314
    %v399 = vunpack.c.h.b16 %v314
    %v400 = vunpack.c.l.b16 %v315
    %v401 = vunpack.c.h.b16 %v315
    %v402 = vunpack.c.l.b16 %v316
    %v403 = vunpack.c.h.b16 %v316
    %v404 = vunpack.c.l.b16 %v317
    %v405 = vunpack.c.h.b16 %v317
    %v406 = vunpack.c.l.b16 %v318
    %v407 = vunpack.c.h.b16 %v318
    %v408 = vunpack.c.l.b16 %v319
    %v409 = vunpack.c.h.b16 %v319
    %v410 = vunpack.c.l.b16 %v320
    %v411 = vunpack.c.h.b16 %v320
    %v412 = vunpack.c.l.b16 %v321
    %v413 = vunpack.c.h.b16 %v321
    %v414 = vunpack.c.l.b16 %v322
    %v415 = vunpack.c.h.b16 %v322
    %v416 = vunpack.c.l.b16 %v323
    %v417 = vunpack.c.h.b16 %v323
    %v418 = vunpack.c.l.b16 %v324
    %v419 = vunpack.c.h.b16 %v324
    %v420 = vunpack.c.l.b16 %v325
    %v421 = vunpack.c.h.b16 %v325
    %v422 = vpack.c.b16 %v360, %v358
    %v423 = vpack.c.b16 %v361, %v359
    %v424 = vpack.c.b16 %v364, %v362
    %v425 = vpack.c.b16 %v365, %v363
    %v426 = vpack.c.b16 %v368, %v366
    %v427 = vpack.c.b16 %v369, %v367
    %v428 = vpack.c.b16 %v372, %v370
    %v429 = vpack.c.b16 %v373, %v371
    %v430 = vpack.c.b16 %v376, %v374
    %v431 = vpack.c.b16 %v377, %v375
    %v432 = vpack.c.b16 %v380, %v378
    %v433 = vpack.c.b16 %v381, %v379
    %v434 = vpack.c.b16 %v384, %v382
    %v435 = vpack.c.b16 %v385, %v383
    %v436 = vpack.c.b16 %v388, %v386
    %v437 = vpack.c.b16 %v389, %v387
    %v438 = vpack.c.b16 %v392, %v390
    %v439 = vpack.c.b16 %v393, %v391
    %v440 = vpack.c.b16 %v396, %v394
    %v441 = vpack.c.b16 %v397, %v395
    %v442 = vpack.c.b16 %v400, %v398
    %v443 = vpack.c.b16 %v401, %v399
    %v444 = vpack.c.b16 %v404, %v402
    %v445 = vpack.c.b16 %v405, %v403
    %v446 = vpack.c.b16 %v408, %v406
    %v447 = vpack.c.b16 %v409, %v407
    %v448 = vpack.c.b16 %v412, %v410
    %v449 = vpack.c.b16 %v413, %v411
    %v450 = vpack.c.b16 %v416, %v414
    %v451 = vpack.c.b16 %v417, %v415
    %v452 = vpack.c.b16 %v420, %v418
    %v453 = vpack.c.b16 %v421, %v419
    %486 = vmatprep.subr.bf16.mxu0 0
    %487 = vmatpush1.bf16.msra.mxu0 %v286
    %488 = vmatprep.subr.bf16.mxu0 0
    %489 = vmatpush1.bf16.msra.mxu0 %v287
    %490 = vmatprep.subr.bf16.mxu0 0
    %491 = vmatpush1.bf16.msra.mxu0 %v288
    %492 = vmatprep.subr.bf16.mxu0 0
    %493 = vmatpush1.bf16.msra.mxu0 %v289
    %494 = vmatprep.subr.bf16.mxu0 0
    %495 = vmatpush1.bf16.msra.mxu0 %v290
    %496 = vmatprep.subr.bf16.mxu0 0
    %497 = vmatpush1.bf16.msra.mxu0 %v291
    %498 = vmatprep.subr.bf16.mxu0 0
    %499 = vmatpush1.bf16.msra.mxu0 %v292
    %500 = vmatprep.subr.bf16.mxu0 0
    %501 = vmatpush1.bf16.msra.mxu0 %v293
    %502 = vmatprep.subr.bf16.mxu0 0
    %503 = vmatpush1.bf16.msra.mxu0 %v286
    %504 = vmatprep.subr.bf16.mxu0 0
    %505 = vmatpush1.bf16.msra.mxu0 %v287
    %506 = vmatprep.subr.bf16.mxu0 0
    %507 = vmatpush1.bf16.msra.mxu0 %v288
    %508 = vmatprep.subr.bf16.mxu0 0
    %509 = vmatpush1.bf16.msra.mxu0 %v289
    %510 = vmatprep.subr.bf16.mxu0 0
    %511 = vmatpush1.bf16.msra.mxu0 %v290
    %512 = vmatprep.subr.bf16.mxu0 0
    %513 = vmatpush1.bf16.msra.mxu0 %v291
    %514 = vmatprep.subr.bf16.mxu0 0
    %515 = vmatpush1.bf16.msra.mxu0 %v292
    %516 = vmatprep.subr.bf16.mxu0 0
    %517 = vmatpush1.bf16.msra.mxu0 %v293
    %518 = vmatprep.mubr.bf16.mxu0 %v423
    %519 = vmatmul.mubr.bf16.gmra.mrb[0].mxu0 %v422
    %v520 = vpop.f32.mrb[0].mxu0
    %v521 = vadd.f32 0.0, %v520
    %v522 = vpop.f32.mrb[0].mxu0
    %v523 = vpop.f32.mrb[0].mxu0
    %v524 = vadd.f32 0.0, %v523
    %v525 = vpop.f32.mrb[0].mxu0
    %526 = vmatprep.mubr.bf16.mxu0 %v425
    %527 = vmatmul.mubr.bf16.gmra.mrb[0].mxu0 %v424
    %v528 = vpop.f32.mrb[0].mxu0
    %v529 = vadd.f32 0.0, %v528
    %v530 = vpop.f32.mrb[0].mxu0
    %v531 = vpop.f32.mrb[0].mxu0
    %v532 = vadd.f32 0.0, %v531
    %v533 = vpop.f32.mrb[0].mxu0
    %534 = vmatprep.mubr.bf16.mxu0 %v427
    %535 = vmatmul.mubr.bf16.gmra.mrb[0].mxu0 %v426
    %v536 = vpop.f32.mrb[0].mxu0
    %v537 = vadd.f32 0.0, %v536
    %v538 = vpop.f32.mrb[0].mxu0
    %v539 = vpop.f32.mrb[0].mxu0
    %v540 = vadd.f32 0.0, %v539
    %v541 = vpop.f32.mrb[0].mxu0
    %542 = vmatprep.mubr.bf16.mxu0 %v429
    %543 = vmatmul.mubr.bf16.gmra.mrb[0].mxu0 %v428
    %v544 = vpop.f32.mrb[0].mxu0
    %v545 = vadd.f32 0.0, %v544
    %v546 = vpop.f32.mrb[0].mxu0
    %v547 = vpop.f32.mrb[0].mxu0
    %v548 = vadd.f32 0.0, %v547
    %v549 = vpop.f32.mrb[0].mxu0
    %550 = vmatprep.mubr.bf16.mxu0 %v431
    %551 = vmatmul.mubr.bf16.gmra.mrb[0].mxu0 %v430
    %v552 = vpop.f32.mrb[0].mxu0
    %v553 = vadd.f32 0.0, %v552
    %v554 = vpop.f32.mrb[0].mxu0
    %v555 = vpop.f32.mrb[0].mxu0
    %v556 = vadd.f32 0.0, %v555
    %v557 = vpop.f32.mrb[0].mxu0
    %558 = vmatprep.mubr.bf16.mxu0 %v433
    %559 = vmatmul.mubr.bf16.gmra.mrb[0].mxu0 %v432
    %v560 = vpop.f32.mrb[0].mxu0
    %v561 = vadd.f32 0.0, %v560
    %v562 = vpop.f32.mrb[0].mxu0
    %v563 = vpop.f32.mrb[0].mxu0
    %v564 = vadd.f32 0.0, %v563
    %v565 = vpop.f32.mrb[0].mxu0
    %566 = vmatprep.mubr.bf16.mxu0 %v435
    %567 = vmatmul.mubr.bf16.gmra.mrb[0].mxu0 %v434
    %v568 = vpop.f32.mrb[0].mxu0
    %v569 = vadd.f32 0.0, %v568
    %v570 = vpop.f32.mrb[0].mxu0
    %v571 = vpop.f32.mrb[0].mxu0
    %v572 = vadd.f32 0.0, %v571
    %v573 = vpop.f32.mrb[0].mxu0
    %574 = vmatprep.mubr.bf16.mxu0 %v437
    %575 = vmatmul.mubr.bf16.gmra.mrb[0].mxu0 %v436
    %v576 = vpop.f32.mrb[0].mxu0
    %v577 = vadd.f32 0.0, %v576
    %v578 = vpop.f32.mrb[0].mxu0
    %v579 = vpop.f32.mrb[0].mxu0
    %v580 = vadd.f32 0.0, %v579
    %v581 = vpop.f32.mrb[0].mxu0
    %582 = vmatprep.mubr.bf16.mxu0 %v439
    %583 = vmatmul.mubr.bf16.gmra.mrb[0].mxu0 %v438
    %v584 = vpop.f32.mrb[0].mxu0
    %v585 = vadd.f32 0.0, %v584
    %v586 = vpop.f32.mrb[0].mxu0
    %v587 = vpop.f32.mrb[0].mxu0
    %v588 = vadd.f32 0.0, %v587
    %v589 = vpop.f32.mrb[0].mxu0
    %590 = vmatprep.mubr.bf16.mxu0 %v441
    %591 = vmatmul.mubr.bf16.gmra.mrb[0].mxu0 %v440
    %v592 = vpop.f32.mrb[0].mxu0
    %v593 = vadd.f32 0.0, %v592
    %v594 = vpop.f32.mrb[0].mxu0
    %v595 = vpop.f32.mrb[0].mxu0
    %v596 = vadd.f32 0.0, %v595
    %v597 = vpop.f32.mrb[0].mxu0
    %598 = vmatprep.mubr.bf16.mxu0 %v443
    %599 = vmatmul.mubr.bf16.gmra.mrb[0].mxu0 %v442
    %v600 = vpop.f32.mrb[0].mxu0
    %v601 = vadd.f32 0.0, %v600
    %v602 = vpop.f32.mrb[0].mxu0
    %v603 = vpop.f32.mrb[0].mxu0
    %v604 = vadd.f32 0.0, %v603
    %v605 = vpop.f32.mrb[0].mxu0
    %606 = vmatprep.mubr.bf16.mxu0 %v445
    %607 = vmatmul.mubr.bf16.gmra.mrb[0].mxu0 %v444
    %v608 = vpop.f32.mrb[0].mxu0
    %v609 = vadd.f32 0.0, %v608
    %v610 = vpop.f32.mrb[0].mxu0
    %v611 = vpop.f32.mrb[0].mxu0
    %v612 = vadd.f32 0.0, %v611
    %v613 = vpop.f32.mrb[0].mxu0
    %614 = vmatprep.mubr.bf16.mxu0 %v447
    %615 = vmatmul.mubr.bf16.gmra.mrb[0].mxu0 %v446
    %v616 = vpop.f32.mrb[0].mxu0
    %v617 = vadd.f32 0.0, %v616
    %v618 = vpop.f32.mrb[0].mxu0
    %v619 = vpop.f32.mrb[0].mxu0
    %v620 = vadd.f32 0.0, %v619
    %v621 = vpop.f32.mrb[0].mxu0
    %622 = vmatprep.mubr.bf16.mxu0 %v449
    %623 = vmatmul.mubr.bf16.gmra.mrb[0].mxu0 %v448
    %v624 = vpop.f32.mrb[0].mxu0
    %v625 = vadd.f32 0.0, %v624
    %v626 = vpop.f32.mrb[0].mxu0
    %v627 = vpop.f32.mrb[0].mxu0
    %v628 = vadd.f32 0.0, %v627
    %v629 = vpop.f32.mrb[0].mxu0
    %630 = vmatprep.mubr.bf16.mxu0 %v451
    %631 = vmatmul.mubr.bf16.gmra.mrb[0].mxu0 %v450
    %v632 = vpop.f32.mrb[0].mxu0
    %v633 = vadd.f32 0.0, %v632
    %v634 = vpop.f32.mrb[0].mxu0
    %v635 = vpop.f32.mrb[0].mxu0
    %v636 = vadd.f32 0.0, %v635
    %v637 = vpop.f32.mrb[0].mxu0
    %638 = vmatprep.mubr.bf16.mxu0 %v453
    %639 = vmatmul.mubr.bf16.gmra.mrb[0].mxu0 %v452
    %v640 = vpop.f32.mrb[0].mxu0
    %v641 = vadd.f32 0.0, %v640
    %v642 = vpop.f32.mrb[0].mxu0
    %v643 = vpop.f32.mrb[0].mxu0
    %v644 = vadd.f32 0.0, %v643
    %v645 = vpop.f32.mrb[0].mxu0
    %646 = vdwg.mxu0
    %v647 = vmul.f32 %v521, 0.01
    %v648 = vmul.f32 %v524, 0.01
    %v649 = vmul.f32 %v529, 0.01
    %v650 = vmul.f32 %v532, 0.01
    %v651 = vmul.f32 %v537, 0.01
    %v652 = vmul.f32 %v540, 0.01
    %v653 = vmul.f32 %v545, 0.01
    %v654 = vmul.f32 %v548, 0.01
    %v655 = vmul.f32 %v553, 0.01
    %v656 = vmul.f32 %v556, 0.01
    %v657 = vmul.f32 %v561, 0.01
    %v658 = vmul.f32 %v564, 0.01
    %v659 = vmul.f32 %v569, 0.01
    %v660 = vmul.f32 %v572, 0.01
    %v661 = vmul.f32 %v577, 0.01
    %v662 = vmul.f32 %v580, 0.01
    %v663 = vmul.f32 %v585, 0.01
    %v664 = vmul.f32 %v588, 0.01
    %v665 = vmul.f32 %v593, 0.01
    %v666 = vmul.f32 %v596, 0.01
    %v667 = vmul.f32 %v601, 0.01
    %v668 = vmul.f32 %v604, 0.01
    %v669 = vmul.f32 %v609, 0.01
    %v670 = vmul.f32 %v612, 0.01
    %v671 = vmul.f32 %v617, 0.01
    %v672 = vmul.f32 %v620, 0.01
    %v673 = vmul.f32 %v625, 0.01
    %v674 = vmul.f32 %v628, 0.01
    %v675 = vmul.f32 %v633, 0.01
    %v676 = vmul.f32 %v636, 0.01
    %v677 = vmul.f32 %v641, 0.01
    %v678 = vmul.f32 %v644, 0.01
    %v679 = vmax.f32 %v521, %v647
    %v680 = vmax.f32 %v524, %v648
    %v681 = vmax.f32 %v529, %v649
    %v682 = vmax.f32 %v532, %v650
    %v683 = vmax.f32 %v537, %v651
    %v684 = vmax.f32 %v540, %v652
    %v685 = vmax.f32 %v545, %v653
    %v686 = vmax.f32 %v548, %v654
    %v687 = vmax.f32 %v553, %v655
    %v688 = vmax.f32 %v556, %v656
    %v689 = vmax.f32 %v561, %v657
    %v690 = vmax.f32 %v564, %v658
    %v691 = vmax.f32 %v569, %v659
    %v692 = vmax.f32 %v572, %v660
    %v693 = vmax.f32 %v577, %v661
    %v694 = vmax.f32 %v580, %v662
    %v695 = vmax.f32 %v585, %v663
    %v696 = vmax.f32 %v588, %v664
    %v697 = vmax.f32 %v593, %v665
    %v698 = vmax.f32 %v596, %v666
    %v699 = vmax.f32 %v601, %v667
    %v700 = vmax.f32 %v604, %v668
    %v701 = vmax.f32 %v609, %v669
    %v702 = vmax.f32 %v612, %v670
    %v703 = vmax.f32 %v617, %v671
    %v704 = vmax.f32 %v620, %v672
    %v705 = vmax.f32 %v625, %v673
    %v706 = vmax.f32 %v628, %v674
    %v707 = vmax.f32 %v633, %v675
    %v708 = vmax.f32 %v636, %v676
    %v709 = vmax.f32 %v641, %v677
    %v710 = vmax.f32 %v644, %v678
    %v711 = vpack.c.bf16 %v680, %v679
    %v712 = vpack.c.bf16 %v682, %v681
    %v713 = vpack.c.bf16 %v684, %v683
    %v714 = vpack.c.bf16 %v686, %v685
    %v715 = vpack.c.bf16 %v688, %v687
    %v716 = vpack.c.bf16 %v690, %v689
    %v717 = vpack.c.bf16 %v692, %v691
    %v718 = vpack.c.bf16 %v694, %v693
    %v719 = vpack.c.bf16 %v696, %v695
    %v720 = vpack.c.bf16 %v698, %v697
    %v721 = vpack.c.bf16 %v700, %v699
    %v722 = vpack.c.bf16 %v702, %v701
    %v723 = vpack.c.bf16 %v704, %v703
    %v724 = vpack.c.bf16 %v706, %v705
    %v725 = vpack.c.bf16 %v708, %v707
    %v726 = vpack.c.bf16 %v710, %v709
    %727 = vmatprep.subr.bf16.mxu0 0
    %728 = vmatpush1.bf16.msra.mxu0 %v173
    %729 = vmatprep.subr.bf16.mxu0 0
    %730 = vmatpush1.bf16.msra.mxu0 %v174
    %731 = vmatprep.subr.bf16.mxu0 0
    %732 = vmatpush1.bf16.msra.mxu0 %v175
    %733 = vmatprep.subr.bf16.mxu0 0
    %734 = vmatpush1.bf16.msra.mxu0 %v176
    %735 = vmatprep.subr.bf16.mxu0 0
    %736 = vmatpush1.bf16.msra.mxu0 %v177
    %737 = vmatprep.subr.bf16.mxu0 0
    %738 = vmatpush1.bf16.msra.mxu0 %v178
    %739 = vmatprep.subr.bf16.mxu0 0
    %740 = vmatpush1.bf16.msra.mxu0 %v179
    %741 = vmatprep.subr.bf16.mxu0 0
    %742 = vmatpush1.bf16.msra.mxu0 %v180
    %743 = vmatprep.subr.bf16.mxu0 0
    %744 = vmatpush1.bf16.msra.mxu0 0
    %745 = vmatprep.subr.bf16.mxu0 0
    %746 = vmatpush1.bf16.msra.mxu0 0
    %747 = vmatprep.subr.bf16.mxu0 0
    %748 = vmatpush1.bf16.msra.mxu0 0
    %749 = vmatprep.subr.bf16.mxu0 0
    %750 = vmatpush1.bf16.msra.mxu0 0
    %751 = vmatprep.subr.bf16.mxu0 0
    %752 = vmatpush1.bf16.msra.mxu0 0
    %753 = vmatprep.subr.bf16.mxu0 0
    %754 = vmatpush1.bf16.msra.mxu0 0
    %755 = vmatprep.subr.bf16.mxu0 0
    %756 = vmatpush1.bf16.msra.mxu0 0
    %757 = vmatprep.subr.bf16.mxu0 0
    %758 = vmatpush1.bf16.msra.mxu0 0
    %759 = vmatprep.mubr.bf16.mxu0 0
    %760 = vmatmul.mubr.bf16.gmra.mrb[0].mxu0 %v711
    %v761 = vpop.f32.mrb[0].mxu0
    %v762 = vadd.f32 0.0, %v761
    %v763 = vpop.f32.mrb[0].mxu0
    %v764 = vpop.f32.mrb[0].mxu0
    %v765 = vadd.f32 0.0, %v764
    %v766 = vpop.f32.mrb[0].mxu0
    %767 = vmatprep.mubr.bf16.mxu0 0
    %768 = vmatmul.mubr.bf16.gmra.mrb[0].mxu0 %v712
    %v769 = vpop.f32.mrb[0].mxu0
    %v770 = vadd.f32 0.0, %v769
    %v771 = vpop.f32.mrb[0].mxu0
    %v772 = vpop.f32.mrb[0].mxu0
    %v773 = vadd.f32 0.0, %v772
    %v774 = vpop.f32.mrb[0].mxu0
    %775 = vmatprep.mubr.bf16.mxu0 0
    %776 = vmatmul.mubr.bf16.gmra.mrb[0].mxu0 %v713
    %v777 = vpop.f32.mrb[0].mxu0
    %v778 = vadd.f32 0.0, %v777
    %v779 = vpop.f32.mrb[0].mxu0
    %v780 = vpop.f32.mrb[0].mxu0
    %v781 = vadd.f32 0.0, %v780
    %v782 = vpop.f32.mrb[0].mxu0
    %783 = vmatprep.mubr.bf16.mxu0 0
    %784 = vmatmul.mubr.bf16.gmra.mrb[0].mxu0 %v714
    %v785 = vpop.f32.mrb[0].mxu0
    %v786 = vadd.f32 0.0, %v785
    %v787 = vpop.f32.mrb[0].mxu0
    %v788 = vpop.f32.mrb[0].mxu0
    %v789 = vadd.f32 0.0, %v788
    %v790 = vpop.f32.mrb[0].mxu0
    %791 = vmatprep.mubr.bf16.mxu0 0
    %792 = vmatmul.mubr.bf16.gmra.mrb[0].mxu0 %v715
    %v793 = vpop.f32.mrb[0].mxu0
    %v794 = vadd.f32 0.0, %v793
    %v795 = vpop.f32.mrb[0].mxu0
    %v796 = vpop.f32.mrb[0].mxu0
    %v797 = vadd.f32 0.0, %v796
    %v798 = vpop.f32.mrb[0].mxu0
    %799 = vmatprep.mubr.bf16.mxu0 0
    %800 = vmatmul.mubr.bf16.gmra.mrb[0].mxu0 %v716
    %v801 = vpop.f32.mrb[0].mxu0
    %v802 = vadd.f32 0.0, %v801
    %v803 = vpop.f32.mrb[0].mxu0
    %v804 = vpop.f32.mrb[0].mxu0
    %v805 = vadd.f32 0.0, %v804
    %v806 = vpop.f32.mrb[0].mxu0
    %807 = vmatprep.mubr.bf16.mxu0 0
    %808 = vmatmul.mubr.bf16.gmra.mrb[0].mxu0 %v717
    %v809 = vpop.f32.mrb[0].mxu0
    %v810 = vadd.f32 0.0, %v809
    %v811 = vpop.f32.mrb[0].mxu0
    %v812 = vpop.f32.mrb[0].mxu0
    %v813 = vadd.f32 0.0, %v812
    %v814 = vpop.f32.mrb[0].mxu0
    %815 = vmatprep.mubr.bf16.mxu0 0
    %816 = vmatmul.mubr.bf16.gmra.mrb[0].mxu0 %v718
    %v817 = vpop.f32.mrb[0].mxu0
    %v818 = vadd.f32 0.0, %v817
    %v819 = vpop.f32.mrb[0].mxu0
    %v820 = vpop.f32.mrb[0].mxu0
    %v821 = vadd.f32 0.0, %v820
    %v822 = vpop.f32.mrb[0].mxu0
    %823 = vmatprep.mubr.bf16.mxu0 0
    %824 = vmatmul.mubr.bf16.gmra.mrb[0].mxu0 %v719
    %v825 = vpop.f32.mrb[0].mxu0
    %v826 = vadd.f32 0.0, %v825
    %v827 = vpop.f32.mrb[0].mxu0
    %v828 = vpop.f32.mrb[0].mxu0
    %v829 = vadd.f32 0.0, %v828
    %v830 = vpop.f32.mrb[0].mxu0
    %831 = vmatprep.mubr.bf16.mxu0 0
    %832 = vmatmul.mubr.bf16.gmra.mrb[0].mxu0 %v720
    %v833 = vpop.f32.mrb[0].mxu0
    %v834 = vadd.f32 0.0, %v833
    %v835 = vpop.f32.mrb[0].mxu0
    %v836 = vpop.f32.mrb[0].mxu0
    %v837 = vadd.f32 0.0, %v836
    %v838 = vpop.f32.mrb[0].mxu0
    %839 = vmatprep.mubr.bf16.mxu0 0
    %840 = vmatmul.mubr.bf16.gmra.mrb[0].mxu0 %v721
    %v841 = vpop.f32.mrb[0].mxu0
    %v842 = vadd.f32 0.0, %v841
    %v843 = vpop.f32.mrb[0].mxu0
    %v844 = vpop.f32.mrb[0].mxu0
    %v845 = vadd.f32 0.0, %v844
    %v846 = vpop.f32.mrb[0].mxu0
    %847 = vmatprep.mubr.bf16.mxu0 0
    %848 = vmatmul.mubr.bf16.gmra.mrb[0].mxu0 %v722
    %v849 = vpop.f32.mrb[0].mxu0
    %v850 = vadd.f32 0.0, %v849
    %v851 = vpop.f32.mrb[0].mxu0
    %v852 = vpop.f32.mrb[0].mxu0
    %v853 = vadd.f32 0.0, %v852
    %v854 = vpop.f32.mrb[0].mxu0
    %855 = vmatprep.mubr.bf16.mxu0 0
    %856 = vmatmul.mubr.bf16.gmra.mrb[0].mxu0 %v723
    %v857 = vpop.f32.mrb[0].mxu0
    %v858 = vadd.f32 0.0, %v857
    %v859 = vpop.f32.mrb[0].mxu0
    %v860 = vpop.f32.mrb[0].mxu0
    %v861 = vadd.f32 0.0, %v860
    %v862 = vpop.f32.mrb[0].mxu0
    %863 = vmatprep.mubr.bf16.mxu0 0
    %864 = vmatmul.mubr.bf16.gmra.mrb[0].mxu0 %v724
    %v865 = vpop.f32.mrb[0].mxu0
    %v866 = vadd.f32 0.0, %v865
    %v867 = vpop.f32.mrb[0].mxu0
    %v868 = vpop.f32.mrb[0].mxu0
    %v869 = vadd.f32 0.0, %v868
    %v870 = vpop.f32.mrb[0].mxu0
    %871 = vmatprep.mubr.bf16.mxu0 0
    %872 = vmatmul.mubr.bf16.gmra.mrb[0].mxu0 %v725
    %v873 = vpop.f32.mrb[0].mxu0
    %v874 = vadd.f32 0.0, %v873
    %v875 = vpop.f32.mrb[0].mxu0
    %v876 = vpop.f32.mrb[0].mxu0
    %v877 = vadd.f32 0.0, %v876
    %v878 = vpop.f32.mrb[0].mxu0
    %879 = vmatprep.mubr.bf16.mxu0 0
    %880 = vmatmul.mubr.bf16.gmra.mrb[0].mxu0 %v726
    %v881 = vpop.f32.mrb[0].mxu0
    %v882 = vadd.f32 0.0, %v881
    %v883 = vpop.f32.mrb[0].mxu0
    %v884 = vpop.f32.mrb[0].mxu0
    %v885 = vadd.f32 0.0, %v884
    %v886 = vpop.f32.mrb[0].mxu0
    %887 = vdwg.mxu0
    %v888 = vpack.c.bf16 %v765, %v762
    %v889 = vpack.c.bf16 %v773, %v770
    %v890 = vpack.c.bf16 %v781, %v778
    %v891 = vpack.c.bf16 %v789, %v786
    %v892 = vpack.c.bf16 %v797, %v794
    %v893 = vpack.c.bf16 %v805, %v802
    %v894 = vpack.c.bf16 %v813, %v810
    %v895 = vpack.c.bf16 %v821, %v818
    %v896 = vpack.c.bf16 %v829, %v826
    %v897 = vpack.c.bf16 %v837, %v834
    %v898 = vpack.c.bf16 %v845, %v842
    %v899 = vpack.c.bf16 %v853, %v850
    %v900 = vpack.c.bf16 %v861, %v858
    %v901 = vpack.c.bf16 %v869, %v866
    %v902 = vpack.c.bf16 %v877, %v874
    %v903 = vpack.c.bf16 %v885, %v882
    %904 = vmatprep.subr.bf16.mxu0 0
    %905 = vmatpush1.bf16.msra.mxu0 %v888
    %906 = vmatprep.subr.bf16.mxu0 0
    %907 = vmatpush1.bf16.msra.mxu0 %v889
    %908 = vmatprep.subr.bf16.mxu0 0
    %909 = vmatpush1.bf16.msra.mxu0 %v890
    %910 = vmatprep.subr.bf16.mxu0 0
    %911 = vmatpush1.bf16.msra.mxu0 %v891
    %912 = vmatprep.subr.bf16.mxu0 0
    %913 = vmatpush1.bf16.msra.mxu0 %v892
    %914 = vmatprep.subr.bf16.mxu0 0
    %915 = vmatpush1.bf16.msra.mxu0 %v893
    %916 = vmatprep.subr.bf16.mxu0 0
    %917 = vmatpush1.bf16.msra.mxu0 %v894
    %918 = vmatprep.subr.bf16.mxu0 0
    %919 = vmatpush1.bf16.msra.mxu0 %v895
    %920 = vmatprep.subr.bf16.mxu0 0
    %921 = vmatpush1.bf16.msra.mxu0 %v896
    %922 = vmatprep.subr.bf16.mxu0 0
    %923 = vmatpush1.bf16.msra.mxu0 %v897
    %924 = vmatprep.subr.bf16.mxu0 0
    %925 = vmatpush1.bf16.msra.mxu0 %v898
    %926 = vmatprep.subr.bf16.mxu0 0
    %927 = vmatpush1.bf16.msra.mxu0 %v899
    %928 = vmatprep.subr.bf16.mxu0 0
    %929 = vmatpush1.bf16.msra.mxu0 %v900
    %930 = vmatprep.subr.bf16.mxu0 0
    %931 = vmatpush1.bf16.msra.mxu0 %v901
    %932 = vmatprep.subr.bf16.mxu0 0
    %933 = vmatpush1.bf16.msra.mxu0 %v902
    %934 = vmatprep.subr.bf16.mxu0 0
    %935 = vmatpush1.bf16.msra.mxu0 %v903
    %936 = vmatprep.mubr.bf16.mxu0 %v423
    %937 = vmatmul.mubr.bf16.gmra.mrb[0].mxu0 %v422
    %v938 = vpop.f32.mrb[0].mxu0
    %v939 = vadd.f32 0.0, %v938
    %v940 = vpop.f32.mrb[0].mxu0
    %v941 = vpop.f32.mrb[0].mxu0
    %v942 = vadd.f32 0.0, %v941
    %v943 = vpop.f32.mrb[0].mxu0
    %944 = vmatprep.mubr.bf16.mxu0 %v425
    %945 = vmatmul.mubr.bf16.gmra.mrb[0].mxu0 %v424
    %v946 = vpop.f32.mrb[0].mxu0
    %v947 = vadd.f32 0.0, %v946
    %v948 = vpop.f32.mrb[0].mxu0
    %v949 = vpop.f32.mrb[0].mxu0
    %v950 = vadd.f32 0.0, %v949
    %v951 = vpop.f32.mrb[0].mxu0
    %952 = vmatprep.mubr.bf16.mxu0 %v427
    %953 = vmatmul.mubr.bf16.gmra.mrb[0].mxu0 %v426
    %v954 = vpop.f32.mrb[0].mxu0
    %v955 = vadd.f32 0.0, %v954
    %v956 = vpop.f32.mrb[0].mxu0
    %v957 = vpop.f32.mrb[0].mxu0
    %v958 = vadd.f32 0.0, %v957
    %v959 = vpop.f32.mrb[0].mxu0
    %960 = vmatprep.mubr.bf16.mxu0 %v429
    %961 = vmatmul.mubr.bf16.gmra.mrb[0].mxu0 %v428
    %v962 = vpop.f32.mrb[0].mxu0
    %v963 = vadd.f32 0.0, %v962
    %v964 = vpop.f32.mrb[0].mxu0
    %v965 = vpop.f32.mrb[0].mxu0
    %v966 = vadd.f32 0.0, %v965
    %v967 = vpop.f32.mrb[0].mxu0
    %968 = vmatprep.mubr.bf16.mxu0 %v431
    %969 = vmatmul.mubr.bf16.gmra.mrb[0].mxu0 %v430
    %v970 = vpop.f32.mrb[0].mxu0
    %v971 = vadd.f32 0.0, %v970
    %v972 = vpop.f32.mrb[0].mxu0
    %v973 = vpop.f32.mrb[0].mxu0
    %v974 = vadd.f32 0.0, %v973
    %v975 = vpop.f32.mrb[0].mxu0
    %976 = vmatprep.mubr.bf16.mxu0 %v433
    %977 = vmatmul.mubr.bf16.gmra.mrb[0].mxu0 %v432
    %v978 = vpop.f32.mrb[0].mxu0
    %v979 = vadd.f32 0.0, %v978
    %v980 = vpop.f32.mrb[0].mxu0
    %v981 = vpop.f32.mrb[0].mxu0
    %v982 = vadd.f32 0.0, %v981
    %v983 = vpop.f32.mrb[0].mxu0
    %984 = vmatprep.mubr.bf16.mxu0 %v435
    %985 = vmatmul.mubr.bf16.gmra.mrb[0].mxu0 %v434
    %v986 = vpop.f32.mrb[0].mxu0
    %v987 = vadd.f32 0.0, %v986
    %v988 = vpop.f32.mrb[0].mxu0
    %v989 = vpop.f32.mrb[0].mxu0
    %v990 = vadd.f32 0.0, %v989
    %v991 = vpop.f32.mrb[0].mxu0
    %992 = vmatprep.mubr.bf16.mxu0 %v437
    %993 = vmatmul.mubr.bf16.gmra.mrb[0].mxu0 %v436
    %v994 = vpop.f32.mrb[0].mxu0
    %v995 = vadd.f32 0.0, %v994
    %v996 = vpop.f32.mrb[0].mxu0
    %v997 = vpop.f32.mrb[0].mxu0
    %v998 = vadd.f32 0.0, %v997
    %v999 = vpop.f32.mrb[0].mxu0
    %1000 = vmatprep.mubr.bf16.mxu0 %v439
    %1001 = vmatmul.mubr.bf16.gmra.mrb[0].mxu0 %v438
    %v1002 = vpop.f32.mrb[0].mxu0
    %v1003 = vadd.f32 0.0, %v1002
    %v1004 = vpop.f32.mrb[0].mxu0
    %v1005 = vpop.f32.mrb[0].mxu0
    %v1006 = vadd.f32 0.0, %v1005
    %v1007 = vpop.f32.mrb[0].mxu0
    %1008 = vmatprep.mubr.bf16.mxu0 %v441
    %1009 = vmatmul.mubr.bf16.gmra.mrb[0].mxu0 %v440
    %v1010 = vpop.f32.mrb[0].mxu0
    %v1011 = vadd.f32 0.0, %v1010
    %v1012 = vpop.f32.mrb[0].mxu0
    %v1013 = vpop.f32.mrb[0].mxu0
    %v1014 = vadd.f32 0.0, %v1013
    %v1015 = vpop.f32.mrb[0].mxu0
    %1016 = vmatprep.mubr.bf16.mxu0 %v443
    %1017 = vmatmul.mubr.bf16.gmra.mrb[0].mxu0 %v442
    %v1018 = vpop.f32.mrb[0].mxu0
    %v1019 = vadd.f32 0.0, %v1018
    %v1020 = vpop.f32.mrb[0].mxu0
    %v1021 = vpop.f32.mrb[0].mxu0
    %v1022 = vadd.f32 0.0, %v1021
    %v1023 = vpop.f32.mrb[0].mxu0
    %1024 = vmatprep.mubr.bf16.mxu0 %v445
    %1025 = vmatmul.mubr.bf16.gmra.mrb[0].mxu0 %v444
    %v1026 = vpop.f32.mrb[0].mxu0
    %v1027 = vadd.f32 0.0, %v1026
    %v1028 = vpop.f32.mrb[0].mxu0
    %v1029 = vpop.f32.mrb[0].mxu0
    %v1030 = vadd.f32 0.0, %v1029
    %v1031 = vpop.f32.mrb[0].mxu0
    %1032 = vmatprep.mubr.bf16.mxu0 %v447
    %1033 = vmatmul.mubr.bf16.gmra.mrb[0].mxu0 %v446
    %v1034 = vpop.f32.mrb[0].mxu0
    %v1035 = vadd.f32 0.0, %v1034
    %v1036 = vpop.f32.mrb[0].mxu0
    %v1037 = vpop.f32.mrb[0].mxu0
    %v1038 = vadd.f32 0.0, %v1037
    %v1039 = vpop.f32.mrb[0].mxu0
    %1040 = vmatprep.mubr.bf16.mxu0 %v449
    %1041 = vmatmul.mubr.bf16.gmra.mrb[0].mxu0 %v448
    %v1042 = vpop.f32.mrb[0].mxu0
    %v1043 = vadd.f32 0.0, %v1042
    %v1044 = vpop.f32.mrb[0].mxu0
    %v1045 = vpop.f32.mrb[0].mxu0
    %v1046 = vadd.f32 0.0, %v1045
    %v1047 = vpop.f32.mrb[0].mxu0
    %1048 = vmatprep.mubr.bf16.mxu0 %v451
    %1049 = vmatmul.mubr.bf16.gmra.mrb[0].mxu0 %v450
    %v1050 = vpop.f32.mrb[0].mxu0
    %v1051 = vadd.f32 0.0, %v1050
    %v1052 = vpop.f32.mrb[0].mxu0
    %v1053 = vpop.f32.mrb[0].mxu0
    %v1054 = vadd.f32 0.0, %v1053
    %v1055 = vpop.f32.mrb[0].mxu0
    %1056 = vmatprep.mubr.bf16.mxu0 %v453
    %1057 = vmatmul.mubr.bf16.gmra.mrb[0].mxu0 %v452
    %v1058 = vpop.f32.mrb[0].mxu0
    %v1059 = vadd.f32 0.0, %v1058
    %v1060 = vpop.f32.mrb[0].mxu0
    %v1061 = vpop.f32.mrb[0].mxu0
    %v1062 = vadd.f32 0.0, %v1061
    %v1063 = vpop.f32.mrb[0].mxu0
    %1064 = vdwg.mxu0
    %v1065 = vmul.f32 %v939, 0.01
    %v1066 = vmul.f32 %v942, 0.01
    %v1067 = vmul.f32 %v947, 0.01
    %v1068 = vmul.f32 %v950, 0.01
    %v1069 = vmul.f32 %v955, 0.01
    %v1070 = vmul.f32 %v958, 0.01
    %v1071 = vmul.f32 %v963, 0.01
    %v1072 = vmul.f32 %v966, 0.01
    %v1073 = vmul.f32 %v971, 0.01
    %v1074 = vmul.f32 %v974, 0.01
    %v1075 = vmul.f32 %v979, 0.01
    %v1076 = vmul.f32 %v982, 0.01
    %v1077 = vmul.f32 %v987, 0.01
    %v1078 = vmul.f32 %v990, 0.01
    %v1079 = vmul.f32 %v995, 0.01
    %v1080 = vmul.f32 %v998, 0.01
    %v1081 = vmul.f32 %v1003, 0.01
    %v1082 = vmul.f32 %v1006, 0.01
    %v1083 = vmul.f32 %v1011, 0.01
    %v1084 = vmul.f32 %v1014, 0.01
    %v1085 = vmul.f32 %v1019, 0.01
    %v1086 = vmul.f32 %v1022, 0.01
    %v1087 = vmul.f32 %v1027, 0.01
    %v1088 = vmul.f32 %v1030, 0.01
    %v1089 = vmul.f32 %v1035, 0.01
    %v1090 = vmul.f32 %v1038, 0.01
    %v1091 = vmul.f32 %v1043, 0.01
    %v1092 = vmul.f32 %v1046, 0.01
    %v1093 = vmul.f32 %v1051, 0.01
    %v1094 = vmul.f32 %v1054, 0.01
    %v1095 = vmul.f32 %v1059, 0.01
    %v1096 = vmul.f32 %v1062, 0.01
    %v1097 = vmax.f32 %v939, %v1065
    %v1098 = vmax.f32 %v942, %v1066
    %v1099 = vmax.f32 %v947, %v1067
    %v1100 = vmax.f32 %v950, %v1068
    %v1101 = vmax.f32 %v955, %v1069
    %v1102 = vmax.f32 %v958, %v1070
    %v1103 = vmax.f32 %v963, %v1071
    %v1104 = vmax.f32 %v966, %v1072
    %v1105 = vmax.f32 %v971, %v1073
    %v1106 = vmax.f32 %v974, %v1074
    %v1107 = vmax.f32 %v979, %v1075
    %v1108 = vmax.f32 %v982, %v1076
    %v1109 = vmax.f32 %v987, %v1077
    %v1110 = vmax.f32 %v990, %v1078
    %v1111 = vmax.f32 %v995, %v1079
    %v1112 = vmax.f32 %v998, %v1080
    %v1113 = vmax.f32 %v1003, %v1081
    %v1114 = vmax.f32 %v1006, %v1082
    %v1115 = vmax.f32 %v1011, %v1083
    %v1116 = vmax.f32 %v1014, %v1084
    %v1117 = vmax.f32 %v1019, %v1085
    %v1118 = vmax.f32 %v1022, %v1086
    %v1119 = vmax.f32 %v1027, %v1087
    %v1120 = vmax.f32 %v1030, %v1088
    %v1121 = vmax.f32 %v1035, %v1089
    %v1122 = vmax.f32 %v1038, %v1090
    %v1123 = vmax.f32 %v1043, %v1091
    %v1124 = vmax.f32 %v1046, %v1092
    %v1125 = vmax.f32 %v1051, %v1093
    %v1126 = vmax.f32 %v1054, %v1094
    %v1127 = vmax.f32 %v1059, %v1095
    %v1128 = vmax.f32 %v1062, %v1096
    %v1129 = vpack.c.bf16 %v1098, %v1097
    %v1130 = vpack.c.bf16 %v1100, %v1099
    %v1131 = vpack.c.bf16 %v1102, %v1101
    %v1132 = vpack.c.bf16 %v1104, %v1103
    %v1133 = vpack.c.bf16 %v1106, %v1105
    %v1134 = vpack.c.bf16 %v1108, %v1107
    %v1135 = vpack.c.bf16 %v1110, %v1109
    %v1136 = vpack.c.bf16 %v1112, %v1111
    %v1137 = vpack.c.bf16 %v1114, %v1113
    %v1138 = vpack.c.bf16 %v1116, %v1115
    %v1139 = vpack.c.bf16 %v1118, %v1117
    %v1140 = vpack.c.bf16 %v1120, %v1119
    %v1141 = vpack.c.bf16 %v1122, %v1121
    %v1142 = vpack.c.bf16 %v1124, %v1123
    %v1143 = vpack.c.bf16 %v1126, %v1125
    %v1144 = vpack.c.bf16 %v1128, %v1127
    %1145 = vmatprep.subr.bf16.mxu0 0
    %1146 = vmatpush1.bf16.msra.mxu0 %v173
    %1147 = vmatprep.subr.bf16.mxu0 0
    %1148 = vmatpush1.bf16.msra.mxu0 %v174
    %1149 = vmatprep.subr.bf16.mxu0 0
    %1150 = vmatpush1.bf16.msra.mxu0 %v175
    %1151 = vmatprep.subr.bf16.mxu0 0
    %1152 = vmatpush1.bf16.msra.mxu0 %v176
    %1153 = vmatprep.subr.bf16.mxu0 0
    %1154 = vmatpush1.bf16.msra.mxu0 %v177
    %1155 = vmatprep.subr.bf16.mxu0 0
    %1156 = vmatpush1.bf16.msra.mxu0 %v178
    %1157 = vmatprep.subr.bf16.mxu0 0
    %1158 = vmatpush1.bf16.msra.mxu0 %v179
    %1159 = vmatprep.subr.bf16.mxu0 0
    %1160 = vmatpush1.bf16.msra.mxu0 %v180
    %1161 = vmatprep.subr.bf16.mxu0 0
    %1162 = vmatpush1.bf16.msra.mxu0 0
    %1163 = vmatprep.subr.bf16.mxu0 0
    %1164 = vmatpush1.bf16.msra.mxu0 0
    %1165 = vmatprep.subr.bf16.mxu0 0
    %1166 = vmatpush1.bf16.msra.mxu0 0
    %1167 = vmatprep.subr.bf16.mxu0 0
    %1168 = vmatpush1.bf16.msra.mxu0 0
    %1169 = vmatprep.subr.bf16.mxu0 0
    %1170 = vmatpush1.bf16.msra.mxu0 0
    %1171 = vmatprep.subr.bf16.mxu0 0
    %1172 = vmatpush1.bf16.msra.mxu0 0
    %1173 = vmatprep.subr.bf16.mxu0 0
    %1174 = vmatpush1.bf16.msra.mxu0 0
    %1175 = vmatprep.subr.bf16.mxu0 0
    %1176 = vmatpush1.bf16.msra.mxu0 0
    %1177 = vmatprep.mubr.bf16.mxu0 0
    %1178 = vmatmul.mubr.bf16.gmra.mrb[0].mxu0 %v1129
    %v1179 = vpop.f32.mrb[0].mxu0
    %v1180 = vadd.f32 0.0, %v1179
    %v1181 = vpop.f32.mrb[0].mxu0
    %v1182 = vpop.f32.mrb[0].mxu0
    %v1183 = vadd.f32 0.0, %v1182
    %v1184 = vpop.f32.mrb[0].mxu0
    %1185 = vmatprep.mubr.bf16.mxu0 0
    %1186 = vmatmul.mubr.bf16.gmra.mrb[0].mxu0 %v1130
    %v1187 = vpop.f32.mrb[0].mxu0
    %v1188 = vadd.f32 0.0, %v1187
    %v1189 = vpop.f32.mrb[0].mxu0
    %v1190 = vpop.f32.mrb[0].mxu0
    %v1191 = vadd.f32 0.0, %v1190
    %v1192 = vpop.f32.mrb[0].mxu0
    %1193 = vmatprep.mubr.bf16.mxu0 0
    %1194 = vmatmul.mubr.bf16.gmra.mrb[0].mxu0 %v1131
    %v1195 = vpop.f32.mrb[0].mxu0
    %v1196 = vadd.f32 0.0, %v1195
    %v1197 = vpop.f32.mrb[0].mxu0
    %v1198 = vpop.f32.mrb[0].mxu0
    %v1199 = vadd.f32 0.0, %v1198
    %v1200 = vpop.f32.mrb[0].mxu0
    %1201 = vmatprep.mubr.bf16.mxu0 0
    %1202 = vmatmul.mubr.bf16.gmra.mrb[0].mxu0 %v1132
    %v1203 = vpop.f32.mrb[0].mxu0
    %v1204 = vadd.f32 0.0, %v1203
    %v1205 = vpop.f32.mrb[0].mxu0
    %v1206 = vpop.f32.mrb[0].mxu0
    %v1207 = vadd.f32 0.0, %v1206
    %v1208 = vpop.f32.mrb[0].mxu0
    %1209 = vmatprep.mubr.bf16.mxu0 0
    %1210 = vmatmul.mubr.bf16.gmra.mrb[0].mxu0 %v1133
    %v1211 = vpop.f32.mrb[0].mxu0
    %v1212 = vadd.f32 0.0, %v1211
    %v1213 = vpop.f32.mrb[0].mxu0
    %v1214 = vpop.f32.mrb[0].mxu0
    %v1215 = vadd.f32 0.0, %v1214
    %v1216 = vpop.f32.mrb[0].mxu0
    %1217 = vmatprep.mubr.bf16.mxu0 0
    %1218 = vmatmul.mubr.bf16.gmra.mrb[0].mxu0 %v1134
    %v1219 = vpop.f32.mrb[0].mxu0
    %v1220 = vadd.f32 0.0, %v1219
    %v1221 = vpop.f32.mrb[0].mxu0
    %v1222 = vpop.f32.mrb[0].mxu0
    %v1223 = vadd.f32 0.0, %v1222
    %v1224 = vpop.f32.mrb[0].mxu0
    %1225 = vmatprep.mubr.bf16.mxu0 0
    %1226 = vmatmul.mubr.bf16.gmra.mrb[0].mxu0 %v1135
    %v1227 = vpop.f32.mrb[0].mxu0
    %v1228 = vadd.f32 0.0, %v1227
    %v1229 = vpop.f32.mrb[0].mxu0
    %v1230 = vpop.f32.mrb[0].mxu0
    %v1231 = vadd.f32 0.0, %v1230
    %v1232 = vpop.f32.mrb[0].mxu0
    %1233 = vmatprep.mubr.bf16.mxu0 0
    %1234 = vmatmul.mubr.bf16.gmra.mrb[0].mxu0 %v1136
    %v1235 = vpop.f32.mrb[0].mxu0
    %v1236 = vadd.f32 0.0, %v1235
    %v1237 = vpop.f32.mrb[0].mxu0
    %v1238 = vpop.f32.mrb[0].mxu0
    %v1239 = vadd.f32 0.0, %v1238
    %v1240 = vpop.f32.mrb[0].mxu0
    %1241 = vmatprep.mubr.bf16.mxu0 0
    %1242 = vmatmul.mubr.bf16.gmra.mrb[0].mxu0 %v1137
    %v1243 = vpop.f32.mrb[0].mxu0
    %v1244 = vadd.f32 0.0, %v1243
    %v1245 = vpop.f32.mrb[0].mxu0
    %v1246 = vpop.f32.mrb[0].mxu0
    %v1247 = vadd.f32 0.0, %v1246
    %v1248 = vpop.f32.mrb[0].mxu0
    %1249 = vmatprep.mubr.bf16.mxu0 0
    %1250 = vmatmul.mubr.bf16.gmra.mrb[0].mxu0 %v1138
    %v1251 = vpop.f32.mrb[0].mxu0
    %v1252 = vadd.f32 0.0, %v1251
    %v1253 = vpop.f32.mrb[0].mxu0
    %v1254 = vpop.f32.mrb[0].mxu0
    %v1255 = vadd.f32 0.0, %v1254
    %v1256 = vpop.f32.mrb[0].mxu0
    %1257 = vmatprep.mubr.bf16.mxu0 0
    %1258 = vmatmul.mubr.bf16.gmra.mrb[0].mxu0 %v1139
    %v1259 = vpop.f32.mrb[0].mxu0
    %v1260 = vadd.f32 0.0, %v1259
    %v1261 = vpop.f32.mrb[0].mxu0
    %v1262 = vpop.f32.mrb[0].mxu0
    %v1263 = vadd.f32 0.0, %v1262
    %v1264 = vpop.f32.mrb[0].mxu0
    %1265 = vmatprep.mubr.bf16.mxu0 0
    %1266 = vmatmul.mubr.bf16.gmra.mrb[0].mxu0 %v1140
    %v1267 = vpop.f32.mrb[0].mxu0
    %v1268 = vadd.f32 0.0, %v1267
    %v1269 = vpop.f32.mrb[0].mxu0
    %v1270 = vpop.f32.mrb[0].mxu0
    %v1271 = vadd.f32 0.0, %v1270
    %v1272 = vpop.f32.mrb[0].mxu0
    %1273 = vmatprep.mubr.bf16.mxu0 0
    %1274 = vmatmul.mubr.bf16.gmra.mrb[0].mxu0 %v1141
    %v1275 = vpop.f32.mrb[0].mxu0
    %v1276 = vadd.f32 0.0, %v1275
    %v1277 = vpop.f32.mrb[0].mxu0
    %v1278 = vpop.f32.mrb[0].mxu0
    %v1279 = vadd.f32 0.0, %v1278
    %v1280 = vpop.f32.mrb[0].mxu0
    %1281 = vmatprep.mubr.bf16.mxu0 0
    %1282 = vmatmul.mubr.bf16.gmra.mrb[0].mxu0 %v1142
    %v1283 = vpop.f32.mrb[0].mxu0
    %v1284 = vadd.f32 0.0, %v1283
    %v1285 = vpop.f32.mrb[0].mxu0
    %v1286 = vpop.f32.mrb[0].mxu0
    %v1287 = vadd.f32 0.0, %v1286
    %v1288 = vpop.f32.mrb[0].mxu0
    %1289 = vmatprep.mubr.bf16.mxu0 0
    %1290 = vmatmul.mubr.bf16.gmra.mrb[0].mxu0 %v1143
    %v1291 = vpop.f32.mrb[0].mxu0
    %v1292 = vadd.f32 0.0, %v1291
    %v1293 = vpop.f32.mrb[0].mxu0
    %v1294 = vpop.f32.mrb[0].mxu0
    %v1295 = vadd.f32 0.0, %v1294
    %v1296 = vpop.f32.mrb[0].mxu0
    %1297 = vmatprep.mubr.bf16.mxu0 0
    %1298 = vmatmul.mubr.bf16.gmra.mrb[0].mxu0 %v1144
    %v1299 = vpop.f32.mrb[0].mxu0
    %v1300 = vadd.f32 0.0, %v1299
    %v1301 = vpop.f32.mrb[0].mxu0
    %v1302 = vpop.f32.mrb[0].mxu0
    %v1303 = vadd.f32 0.0, %v1302
    %v1304 = vpop.f32.mrb[0].mxu0
    %1305 = vdwg.mxu0
    %v1306 = vpack.c.bf16 %v1183, %v1180
    %v1307 = vpack.c.bf16 %v1191, %v1188
    %v1308 = vpack.c.bf16 %v1199, %v1196
    %v1309 = vpack.c.bf16 %v1207, %v1204
    %v1310 = vpack.c.bf16 %v1215, %v1212
    %v1311 = vpack.c.bf16 %v1223, %v1220
    %v1312 = vpack.c.bf16 %v1231, %v1228
    %v1313 = vpack.c.bf16 %v1239, %v1236
    %v1314 = vpack.c.bf16 %v1247, %v1244
    %v1315 = vpack.c.bf16 %v1255, %v1252
    %v1316 = vpack.c.bf16 %v1263, %v1260
    %v1317 = vpack.c.bf16 %v1271, %v1268
    %v1318 = vpack.c.bf16 %v1279, %v1276
    %v1319 = vpack.c.bf16 %v1287, %v1284
    %v1320 = vpack.c.bf16 %v1295, %v1292
    %v1321 = vpack.c.bf16 %v1303, %v1300
    %1322 = vmatprep.subr.bf16.mxu0 0
    %1323 = vmatpush1.bf16.msra.mxu0 %v1306
    %1324 = vmatprep.subr.bf16.mxu0 0
    %1325 = vmatpush1.bf16.msra.mxu0 %v1307
    %1326 = vmatprep.subr.bf16.mxu0 0
    %1327 = vmatpush1.bf16.msra.mxu0 %v1308
    %1328 = vmatprep.subr.bf16.mxu0 0
    %1329 = vmatpush1.bf16.msra.mxu0 %v1309
    %1330 = vmatprep.subr.bf16.mxu0 0
    %1331 = vmatpush1.bf16.msra.mxu0 %v1310
    %1332 = vmatprep.subr.bf16.mxu0 0
    %1333 = vmatpush1.bf16.msra.mxu0 %v1311
    %1334 = vmatprep.subr.bf16.mxu0 0
    %1335 = vmatpush1.bf16.msra.mxu0 %v1312
    %1336 = vmatprep.subr.bf16.mxu0 0
    %1337 = vmatpush1.bf16.msra.mxu0 %v1313
    %1338 = vmatprep.subr.bf16.mxu0 0
    %1339 = vmatpush1.bf16.msra.mxu0 %v1314
    %1340 = vmatprep.subr.bf16.mxu0 0
    %1341 = vmatpush1.bf16.msra.mxu0 %v1315
    %1342 = vmatprep.subr.bf16.mxu0 0
    %1343 = vmatpush1.bf16.msra.mxu0 %v1316
    %1344 = vmatprep.subr.bf16.mxu0 0
    %1345 = vmatpush1.bf16.msra.mxu0 %v1317
    %1346 = vmatprep.subr.bf16.mxu0 0
    %1347 = vmatpush1.bf16.msra.mxu0 %v1318
    %1348 = vmatprep.subr.bf16.mxu0 0
    %1349 = vmatpush1.bf16.msra.mxu0 %v1319
    %1350 = vmatprep.subr.bf16.mxu0 0
    %1351 = vmatpush1.bf16.msra.mxu0 %v1320
    %1352 = vmatprep.subr.bf16.mxu0 0
    %1353 = vmatpush1.bf16.msra.mxu0 %v1321
    %1354 = vmatprep.mubr.bf16.mxu0 %v423
    %1355 = vmatmul.mubr.bf16.gmra.mrb[0].mxu0 %v422
    %v1356 = vpop.f32.mrb[0].mxu0
    %v1357 = vadd.f32 0.0, %v1356
    %v1358 = vpop.f32.mrb[0].mxu0
    %v1359 = vpop.f32.mrb[0].mxu0
    %v1360 = vadd.f32 0.0, %v1359
    %v1361 = vpop.f32.mrb[0].mxu0
    %1362 = vmatprep.mubr.bf16.mxu0 %v425
    %1363 = vmatmul.mubr.bf16.gmra.mrb[0].mxu0 %v424
    %v1364 = vpop.f32.mrb[0].mxu0
    %v1365 = vadd.f32 0.0, %v1364
    %v1366 = vpop.f32.mrb[0].mxu0
    %v1367 = vpop.f32.mrb[0].mxu0
    %v1368 = vadd.f32 0.0, %v1367
    %v1369 = vpop.f32.mrb[0].mxu0
    %1370 = vmatprep.mubr.bf16.mxu0 %v427
    %1371 = vmatmul.mubr.bf16.gmra.mrb[0].mxu0 %v426
    %v1372 = vpop.f32.mrb[0].mxu0
    %v1373 = vadd.f32 0.0, %v1372
    %v1374 = vpop.f32.mrb[0].mxu0
    %v1375 = vpop.f32.mrb[0].mxu0
    %v1376 = vadd.f32 0.0, %v1375
    %v1377 = vpop.f32.mrb[0].mxu0
    %1378 = vmatprep.mubr.bf16.mxu0 %v429
    %1379 = vmatmul.mubr.bf16.gmra.mrb[0].mxu0 %v428
    %v1380 = vpop.f32.mrb[0].mxu0
    %v1381 = vadd.f32 0.0, %v1380
    %v1382 = vpop.f32.mrb[0].mxu0
    %v1383 = vpop.f32.mrb[0].mxu0
    %v1384 = vadd.f32 0.0, %v1383
    %v1385 = vpop.f32.mrb[0].mxu0
    %1386 = vmatprep.mubr.bf16.mxu0 %v431
    %1387 = vmatmul.mubr.bf16.gmra.mrb[0].mxu0 %v430
    %v1388 = vpop.f32.mrb[0].mxu0
    %v1389 = vadd.f32 0.0, %v1388
    %v1390 = vpop.f32.mrb[0].mxu0
    %v1391 = vpop.f32.mrb[0].mxu0
    %v1392 = vadd.f32 0.0, %v1391
    %v1393 = vpop.f32.mrb[0].mxu0
    %1394 = vmatprep.mubr.bf16.mxu0 %v433
    %1395 = vmatmul.mubr.bf16.gmra.mrb[0].mxu0 %v432
    %v1396 = vpop.f32.mrb[0].mxu0
    %v1397 = vadd.f32 0.0, %v1396
    %v1398 = vpop.f32.mrb[0].mxu0
    %v1399 = vpop.f32.mrb[0].mxu0
    %v1400 = vadd.f32 0.0, %v1399
    %v1401 = vpop.f32.mrb[0].mxu0
    %1402 = vmatprep.mubr.bf16.mxu0 %v435
    %1403 = vmatmul.mubr.bf16.gmra.mrb[0].mxu0 %v434
    %v1404 = vpop.f32.mrb[0].mxu0
    %v1405 = vadd.f32 0.0, %v1404
    %v1406 = vpop.f32.mrb[0].mxu0
    %v1407 = vpop.f32.mrb[0].mxu0
    %v1408 = vadd.f32 0.0, %v1407
    %v1409 = vpop.f32.mrb[0].mxu0
    %1410 = vmatprep.mubr.bf16.mxu0 %v437
    %1411 = vmatmul.mubr.bf16.gmra.mrb[0].mxu0 %v436
    %v1412 = vpop.f32.mrb[0].mxu0
    %v1413 = vadd.f32 0.0, %v1412
    %v1414 = vpop.f32.mrb[0].mxu0
    %v1415 = vpop.f32.mrb[0].mxu0
    %v1416 = vadd.f32 0.0, %v1415
    %v1417 = vpop.f32.mrb[0].mxu0
    %1418 = vmatprep.mubr.bf16.mxu0 %v439
    %1419 = vmatmul.mubr.bf16.gmra.mrb[0].mxu0 %v438
    %v1420 = vpop.f32.mrb[0].mxu0
    %v1421 = vadd.f32 0.0, %v1420
    %v1422 = vpop.f32.mrb[0].mxu0
    %v1423 = vpop.f32.mrb[0].mxu0
    %v1424 = vadd.f32 0.0, %v1423
    %v1425 = vpop.f32.mrb[0].mxu0
    %1426 = vmatprep.mubr.bf16.mxu0 %v441
    %1427 = vmatmul.mubr.bf16.gmra.mrb[0].mxu0 %v440
    %v1428 = vpop.f32.mrb[0].mxu0
    %v1429 = vadd.f32 0.0, %v1428
    %v1430 = vpop.f32.mrb[0].mxu0
    %v1431 = vpop.f32.mrb[0].mxu0
    %v1432 = vadd.f32 0.0, %v1431
    %v1433 = vpop.f32.mrb[0].mxu0
    %1434 = vmatprep.mubr.bf16.mxu0 %v443
    %1435 = vmatmul.mubr.bf16.gmra.mrb[0].mxu0 %v442
    %v1436 = vpop.f32.mrb[0].mxu0
    %v1437 = vadd.f32 0.0, %v1436
    %v1438 = vpop.f32.mrb[0].mxu0
    %v1439 = vpop.f32.mrb[0].mxu0
    %v1440 = vadd.f32 0.0, %v1439
    %v1441 = vpop.f32.mrb[0].mxu0
    %1442 = vmatprep.mubr.bf16.mxu0 %v445
    %1443 = vmatmul.mubr.bf16.gmra.mrb[0].mxu0 %v444
    %v1444 = vpop.f32.mrb[0].mxu0
    %v1445 = vadd.f32 0.0, %v1444
    %v1446 = vpop.f32.mrb[0].mxu0
    %v1447 = vpop.f32.mrb[0].mxu0
    %v1448 = vadd.f32 0.0, %v1447
    %v1449 = vpop.f32.mrb[0].mxu0
    %1450 = vmatprep.mubr.bf16.mxu0 %v447
    %1451 = vmatmul.mubr.bf16.gmra.mrb[0].mxu0 %v446
    %v1452 = vpop.f32.mrb[0].mxu0
    %v1453 = vadd.f32 0.0, %v1452
    %v1454 = vpop.f32.mrb[0].mxu0
    %v1455 = vpop.f32.mrb[0].mxu0
    %v1456 = vadd.f32 0.0, %v1455
    %v1457 = vpop.f32.mrb[0].mxu0
    %1458 = vmatprep.mubr.bf16.mxu0 %v449
    %1459 = vmatmul.mubr.bf16.gmra.mrb[0].mxu0 %v448
    %v1460 = vpop.f32.mrb[0].mxu0
    %v1461 = vadd.f32 0.0, %v1460
    %v1462 = vpop.f32.mrb[0].mxu0
    %v1463 = vpop.f32.mrb[0].mxu0
    %v1464 = vadd.f32 0.0, %v1463
    %v1465 = vpop.f32.mrb[0].mxu0
    %1466 = vmatprep.mubr.bf16.mxu0 %v451
    %1467 = vmatmul.mubr.bf16.gmra.mrb[0].mxu0 %v450
    %v1468 = vpop.f32.mrb[0].mxu0
    %v1469 = vadd.f32 0.0, %v1468
    %v1470 = vpop.f32.mrb[0].mxu0
    %v1471 = vpop.f32.mrb[0].mxu0
    %v1472 = vadd.f32 0.0, %v1471
    %v1473 = vpop.f32.mrb[0].mxu0
    %1474 = vmatprep.mubr.bf16.mxu0 %v453
    %1475 = vmatmul.mubr.bf16.gmra.mrb[0].mxu0 %v452
    %v1476 = vpop.f32.mrb[0].mxu0
    %v1477 = vadd.f32 0.0, %v1476
    %v1478 = vpop.f32.mrb[0].mxu0
    %v1479 = vpop.f32.mrb[0].mxu0
    %v1480 = vadd.f32 0.0, %v1479
    %v1481 = vpop.f32.mrb[0].mxu0
    %1482 = vdwg.mxu0
    %v1483 = vmul.f32 %v1357, 0.01
    %v1484 = vmul.f32 %v1360, 0.01
    %v1485 = vmul.f32 %v1365, 0.01
    %v1486 = vmul.f32 %v1368, 0.01
    %v1487 = vmul.f32 %v1373, 0.01
    %v1488 = vmul.f32 %v1376, 0.01
    %v1489 = vmul.f32 %v1381, 0.01
    %v1490 = vmul.f32 %v1384, 0.01
    %v1491 = vmul.f32 %v1389, 0.01
    %v1492 = vmul.f32 %v1392, 0.01
    %v1493 = vmul.f32 %v1397, 0.01
    %v1494 = vmul.f32 %v1400, 0.01
    %v1495 = vmul.f32 %v1405, 0.01
    %v1496 = vmul.f32 %v1408, 0.01
    %v1497 = vmul.f32 %v1413, 0.01
    %v1498 = vmul.f32 %v1416, 0.01
    %v1499 = vmul.f32 %v1421, 0.01
    %v1500 = vmul.f32 %v1424, 0.01
    %v1501 = vmul.f32 %v1429, 0.01
    %v1502 = vmul.f32 %v1432, 0.01
    %v1503 = vmul.f32 %v1437, 0.01
    %v1504 = vmul.f32 %v1440, 0.01
    %v1505 = vmul.f32 %v1445, 0.01
    %v1506 = vmul.f32 %v1448, 0.01
    %v1507 = vmul.f32 %v1453, 0.01
    %v1508 = vmul.f32 %v1456, 0.01
    %v1509 = vmul.f32 %v1461, 0.01
    %v1510 = vmul.f32 %v1464, 0.01
    %v1511 = vmul.f32 %v1469, 0.01
    %v1512 = vmul.f32 %v1472, 0.01
    %v1513 = vmul.f32 %v1477, 0.01
    %v1514 = vmul.f32 %v1480, 0.01
    %v1515 = vmax.f32 %v1357, %v1483
    %v1516 = vmax.f32 %v1360, %v1484
    %v1517 = vmax.f32 %v1365, %v1485
    %v1518 = vmax.f32 %v1368, %v1486
    %v1519 = vmax.f32 %v1373, %v1487
    %v1520 = vmax.f32 %v1376, %v1488
    %v1521 = vmax.f32 %v1381, %v1489
    %v1522 = vmax.f32 %v1384, %v1490
    %v1523 = vmax.f32 %v1389, %v1491
    %v1524 = vmax.f32 %v1392, %v1492
    %v1525 = vmax.f32 %v1397, %v1493
    %v1526 = vmax.f32 %v1400, %v1494
    %v1527 = vmax.f32 %v1405, %v1495
    %v1528 = vmax.f32 %v1408, %v1496
    %v1529 = vmax.f32 %v1413, %v1497
    %v1530 = vmax.f32 %v1416, %v1498
    %v1531 = vmax.f32 %v1421, %v1499
    %v1532 = vmax.f32 %v1424, %v1500
    %v1533 = vmax.f32 %v1429, %v1501
    %v1534 = vmax.f32 %v1432, %v1502
    %v1535 = vmax.f32 %v1437, %v1503
    %v1536 = vmax.f32 %v1440, %v1504
    %v1537 = vmax.f32 %v1445, %v1505
    %v1538 = vmax.f32 %v1448, %v1506
    %v1539 = vmax.f32 %v1453, %v1507
    %v1540 = vmax.f32 %v1456, %v1508
    %v1541 = vmax.f32 %v1461, %v1509
    %v1542 = vmax.f32 %v1464, %v1510
    %v1543 = vmax.f32 %v1469, %v1511
    %v1544 = vmax.f32 %v1472, %v1512
    %v1545 = vmax.f32 %v1477, %v1513
    %v1546 = vmax.f32 %v1480, %v1514
    %v1547 = vpack.c.bf16 %v1516, %v1515
    %v1548 = vpack.c.bf16 %v1518, %v1517
    %v1549 = vpack.c.bf16 %v1520, %v1519
    %v1550 = vpack.c.bf16 %v1522, %v1521
    %v1551 = vpack.c.bf16 %v1524, %v1523
    %v1552 = vpack.c.bf16 %v1526, %v1525
    %v1553 = vpack.c.bf16 %v1528, %v1527
    %v1554 = vpack.c.bf16 %v1530, %v1529
    %v1555 = vpack.c.bf16 %v1532, %v1531
    %v1556 = vpack.c.bf16 %v1534, %v1533
    %v1557 = vpack.c.bf16 %v1536, %v1535
    %v1558 = vpack.c.bf16 %v1538, %v1537
    %v1559 = vpack.c.bf16 %v1540, %v1539
    %v1560 = vpack.c.bf16 %v1542, %v1541
    %v1561 = vpack.c.bf16 %v1544, %v1543
    %v1562 = vpack.c.bf16 %v1546, %v1545
    %1563 = vmatprep.subr.bf16.mxu0 0
    %1564 = vmatpush1.bf16.msra.mxu0 %v173
    %1565 = vmatprep.subr.bf16.mxu0 0
    %1566 = vmatpush1.bf16.msra.mxu0 %v174
    %1567 = vmatprep.subr.bf16.mxu0 0
    %1568 = vmatpush1.bf16.msra.mxu0 %v175
    %1569 = vmatprep.subr.bf16.mxu0 0
    %1570 = vmatpush1.bf16.msra.mxu0 %v176
    %1571 = vmatprep.subr.bf16.mxu0 0
    %1572 = vmatpush1.bf16.msra.mxu0 %v177
    %1573 = vmatprep.subr.bf16.mxu0 0
    %1574 = vmatpush1.bf16.msra.mxu0 %v178
    %1575 = vmatprep.subr.bf16.mxu0 0
    %1576 = vmatpush1.bf16.msra.mxu0 %v179
    %1577 = vmatprep.subr.bf16.mxu0 0
    %1578 = vmatpush1.bf16.msra.mxu0 %v180
    %1579 = vmatprep.subr.bf16.mxu0 0
    %1580 = vmatpush1.bf16.msra.mxu0 0
    %1581 = vmatprep.subr.bf16.mxu0 0
    %1582 = vmatpush1.bf16.msra.mxu0 0
    %1583 = vmatprep.subr.bf16.mxu0 0
    %1584 = vmatpush1.bf16.msra.mxu0 0
    %1585 = vmatprep.subr.bf16.mxu0 0
    %1586 = vmatpush1.bf16.msra.mxu0 0
    %1587 = vmatprep.subr.bf16.mxu0 0
    %1588 = vmatpush1.bf16.msra.mxu0 0
    %1589 = vmatprep.subr.bf16.mxu0 0
    %1590 = vmatpush1.bf16.msra.mxu0 0
    %1591 = vmatprep.subr.bf16.mxu0 0
    %1592 = vmatpush1.bf16.msra.mxu0 0
    %1593 = vmatprep.subr.bf16.mxu0 0
    %1594 = vmatpush1.bf16.msra.mxu0 0
    %1595 = vmatprep.mubr.bf16.mxu0 0
    %1596 = vmatmul.mubr.bf16.gmra.mrb[0].mxu0 %v1547
    %v1597 = vpop.f32.mrb[0].mxu0
    %v1598 = vadd.f32 0.0, %v1597
    %v1599 = vpop.f32.mrb[0].mxu0
    %v1600 = vpop.f32.mrb[0].mxu0
    %v1601 = vadd.f32 0.0, %v1600
    %v1602 = vpop.f32.mrb[0].mxu0
    %1603 = vmatprep.mubr.bf16.mxu0 0
    %1604 = vmatmul.mubr.bf16.gmra.mrb[0].mxu0 %v1548
    %v1605 = vpop.f32.mrb[0].mxu0
    %v1606 = vadd.f32 0.0, %v1605
    %v1607 = vpop.f32.mrb[0].mxu0
    %v1608 = vpop.f32.mrb[0].mxu0
    %v1609 = vadd.f32 0.0, %v1608
    %v1610 = vpop.f32.mrb[0].mxu0
    %1611 = vmatprep.mubr.bf16.mxu0 0
    %1612 = vmatmul.mubr.bf16.gmra.mrb[0].mxu0 %v1549
    %v1613 = vpop.f32.mrb[0].mxu0
    %v1614 = vadd.f32 0.0, %v1613
    %v1615 = vpop.f32.mrb[0].mxu0
    %v1616 = vpop.f32.mrb[0].mxu0
    %v1617 = vadd.f32 0.0, %v1616
    %v1618 = vpop.f32.mrb[0].mxu0
    %1619 = vmatprep.mubr.bf16.mxu0 0
    %1620 = vmatmul.mubr.bf16.gmra.mrb[0].mxu0 %v1550
    %v1621 = vpop.f32.mrb[0].mxu0
    %v1622 = vadd.f32 0.0, %v1621
    %v1623 = vpop.f32.mrb[0].mxu0
    %v1624 = vpop.f32.mrb[0].mxu0
    %v1625 = vadd.f32 0.0, %v1624
    %v1626 = vpop.f32.mrb[0].mxu0
    %1627 = vmatprep.mubr.bf16.mxu0 0
    %1628 = vmatmul.mubr.bf16.gmra.mrb[0].mxu0 %v1551
    %v1629 = vpop.f32.mrb[0].mxu0
    %v1630 = vadd.f32 0.0, %v1629
    %v1631 = vpop.f32.mrb[0].mxu0
    %v1632 = vpop.f32.mrb[0].mxu0
    %v1633 = vadd.f32 0.0, %v1632
    %v1634 = vpop.f32.mrb[0].mxu0
    %1635 = vmatprep.mubr.bf16.mxu0 0
    %1636 = vmatmul.mubr.bf16.gmra.mrb[0].mxu0 %v1552
    %v1637 = vpop.f32.mrb[0].mxu0
    %v1638 = vadd.f32 0.0, %v1637
    %v1639 = vpop.f32.mrb[0].mxu0
    %v1640 = vpop.f32.mrb[0].mxu0
    %v1641 = vadd.f32 0.0, %v1640
    %v1642 = vpop.f32.mrb[0].mxu0
    %1643 = vmatprep.mubr.bf16.mxu0 0
    %1644 = vmatmul.mubr.bf16.gmra.mrb[0].mxu0 %v1553
    %v1645 = vpop.f32.mrb[0].mxu0
    %v1646 = vadd.f32 0.0, %v1645
    %v1647 = vpop.f32.mrb[0].mxu0
    %v1648 = vpop.f32.mrb[0].mxu0
    %v1649 = vadd.f32 0.0, %v1648
    %v1650 = vpop.f32.mrb[0].mxu0
    %1651 = vmatprep.mubr.bf16.mxu0 0
    %1652 = vmatmul.mubr.bf16.gmra.mrb[0].mxu0 %v1554
    %v1653 = vpop.f32.mrb[0].mxu0
    %v1654 = vadd.f32 0.0, %v1653
    %v1655 = vpop.f32.mrb[0].mxu0
    %v1656 = vpop.f32.mrb[0].mxu0
    %v1657 = vadd.f32 0.0, %v1656
    %v1658 = vpop.f32.mrb[0].mxu0
    %1659 = vmatprep.mubr.bf16.mxu0 0
    %1660 = vmatmul.mubr.bf16.gmra.mrb[0].mxu0 %v1555
    %v1661 = vpop.f32.mrb[0].mxu0
    %v1662 = vadd.f32 0.0, %v1661
    %v1663 = vpop.f32.mrb[0].mxu0
    %v1664 = vpop.f32.mrb[0].mxu0
    %v1665 = vadd.f32 0.0, %v1664
    %v1666 = vpop.f32.mrb[0].mxu0
    %1667 = vmatprep.mubr.bf16.mxu0 0
    %1668 = vmatmul.mubr.bf16.gmra.mrb[0].mxu0 %v1556
    %v1669 = vpop.f32.mrb[0].mxu0
    %v1670 = vadd.f32 0.0, %v1669
    %v1671 = vpop.f32.mrb[0].mxu0
    %v1672 = vpop.f32.mrb[0].mxu0
    %v1673 = vadd.f32 0.0, %v1672
    %v1674 = vpop.f32.mrb[0].mxu0
    %1675 = vmatprep.mubr.bf16.mxu0 0
    %1676 = vmatmul.mubr.bf16.gmra.mrb[0].mxu0 %v1557
    %v1677 = vpop.f32.mrb[0].mxu0
    %v1678 = vadd.f32 0.0, %v1677
    %v1679 = vpop.f32.mrb[0].mxu0
    %v1680 = vpop.f32.mrb[0].mxu0
    %v1681 = vadd.f32 0.0, %v1680
    %v1682 = vpop.f32.mrb[0].mxu0
    %1683 = vmatprep.mubr.bf16.mxu0 0
    %1684 = vmatmul.mubr.bf16.gmra.mrb[0].mxu0 %v1558
    %v1685 = vpop.f32.mrb[0].mxu0
    %v1686 = vadd.f32 0.0, %v1685
    %v1687 = vpop.f32.mrb[0].mxu0
    %v1688 = vpop.f32.mrb[0].mxu0
    %v1689 = vadd.f32 0.0, %v1688
    %v1690 = vpop.f32.mrb[0].mxu0
    %1691 = vmatprep.mubr.bf16.mxu0 0
    %1692 = vmatmul.mubr.bf16.gmra.mrb[0].mxu0 %v1559
    %v1693 = vpop.f32.mrb[0].mxu0
    %v1694 = vadd.f32 0.0, %v1693
    %v1695 = vpop.f32.mrb[0].mxu0
    %v1696 = vpop.f32.mrb[0].mxu0
    %v1697 = vadd.f32 0.0, %v1696
    %v1698 = vpop.f32.mrb[0].mxu0
    %1699 = vmatprep.mubr.bf16.mxu0 0
    %1700 = vmatmul.mubr.bf16.gmra.mrb[0].mxu0 %v1560
    %v1701 = vpop.f32.mrb[0].mxu0
    %v1702 = vadd.f32 0.0, %v1701
    %v1703 = vpop.f32.mrb[0].mxu0
    %v1704 = vpop.f32.mrb[0].mxu0
    %v1705 = vadd.f32 0.0, %v1704
    %v1706 = vpop.f32.mrb[0].mxu0
    %1707 = vmatprep.mubr.bf16.mxu0 0
    %1708 = vmatmul.mubr.bf16.gmra.mrb[0].mxu0 %v1561
    %v1709 = vpop.f32.mrb[0].mxu0
    %v1710 = vadd.f32 0.0, %v1709
    %v1711 = vpop.f32.mrb[0].mxu0
    %v1712 = vpop.f32.mrb[0].mxu0
    %v1713 = vadd.f32 0.0, %v1712
    %v1714 = vpop.f32.mrb[0].mxu0
    %1715 = vmatprep.mubr.bf16.mxu0 0
    %1716 = vmatmul.mubr.bf16.gmra.mrb[0].mxu0 %v1562
    %v1717 = vpop.f32.mrb[0].mxu0
    %v1718 = vadd.f32 0.0, %v1717
    %v1719 = vpop.f32.mrb[0].mxu0
    %v1720 = vpop.f32.mrb[0].mxu0
    %v1721 = vadd.f32 0.0, %v1720
    %v1722 = vpop.f32.mrb[0].mxu0
    %1723 = vdwg.mxu0
    %v1724 = vpack.c.bf16 %v1601, %v1598
    %v1725 = vpack.c.bf16 %v1609, %v1606
    %v1726 = vpack.c.bf16 %v1617, %v1614
    %v1727 = vpack.c.bf16 %v1625, %v1622
    %v1728 = vpack.c.bf16 %v1633, %v1630
    %v1729 = vpack.c.bf16 %v1641, %v1638
    %v1730 = vpack.c.bf16 %v1649, %v1646
    %v1731 = vpack.c.bf16 %v1657, %v1654
    %v1732 = vpack.c.bf16 %v1665, %v1662
    %v1733 = vpack.c.bf16 %v1673, %v1670
    %v1734 = vpack.c.bf16 %v1681, %v1678
    %v1735 = vpack.c.bf16 %v1689, %v1686
    %v1736 = vpack.c.bf16 %v1697, %v1694
    %v1737 = vpack.c.bf16 %v1705, %v1702
    %v1738 = vpack.c.bf16 %v1713, %v1710
    %v1739 = vpack.c.bf16 %v1721, %v1718
    %1740 = vmatprep.subr.bf16.mxu0 0
    %1741 = vmatpush1.bf16.msra.mxu0 %v1724
    %1742 = vmatprep.subr.bf16.mxu0 0
    %1743 = vmatpush1.bf16.msra.mxu0 %v1725
    %1744 = vmatprep.subr.bf16.mxu0 0
    %1745 = vmatpush1.bf16.msra.mxu0 %v1726
    %1746 = vmatprep.subr.bf16.mxu0 0
    %1747 = vmatpush1.bf16.msra.mxu0 %v1727
    %1748 = vmatprep.subr.bf16.mxu0 0
    %1749 = vmatpush1.bf16.msra.mxu0 %v1728
    %1750 = vmatprep.subr.bf16.mxu0 0
    %1751 = vmatpush1.bf16.msra.mxu0 %v1729
    %1752 = vmatprep.subr.bf16.mxu0 0
    %1753 = vmatpush1.bf16.msra.mxu0 %v1730
    %1754 = vmatprep.subr.bf16.mxu0 0
    %1755 = vmatpush1.bf16.msra.mxu0 %v1731
    %1756 = vmatprep.subr.bf16.mxu0 0
    %1757 = vmatpush1.bf16.msra.mxu0 %v1732
    %1758 = vmatprep.subr.bf16.mxu0 0
    %1759 = vmatpush1.bf16.msra.mxu0 %v1733
    %1760 = vmatprep.subr.bf16.mxu0 0
    %1761 = vmatpush1.bf16.msra.mxu0 %v1734
    %1762 = vmatprep.subr.bf16.mxu0 0
    %1763 = vmatpush1.bf16.msra.mxu0 %v1735
    %1764 = vmatprep.subr.bf16.mxu0 0
    %1765 = vmatpush1.bf16.msra.mxu0 %v1736
    %1766 = vmatprep.subr.bf16.mxu0 0
    %1767 = vmatpush1.bf16.msra.mxu0 %v1737
    %1768 = vmatprep.subr.bf16.mxu0 0
    %1769 = vmatpush1.bf16.msra.mxu0 %v1738
    %1770 = vmatprep.subr.bf16.mxu0 0
    %1771 = vmatpush1.bf16.msra.mxu0 %v1739
    %1772 = vmatprep.mubr.bf16.mxu0 %v423
    %1773 = vmatmul.mubr.bf16.gmra.mrb[0].mxu0 %v422
    %v1774 = vpop.f32.mrb[0].mxu0
    %v1775 = vadd.f32 0.0, %v1774
    %v1776 = vpop.f32.mrb[0].mxu0
    %v1777 = vpop.f32.mrb[0].mxu0
    %v1778 = vadd.f32 0.0, %v1777
    %v1779 = vpop.f32.mrb[0].mxu0
    %1780 = vmatprep.mubr.bf16.mxu0 %v425
    %1781 = vmatmul.mubr.bf16.gmra.mrb[0].mxu0 %v424
    %v1782 = vpop.f32.mrb[0].mxu0
    %v1783 = vadd.f32 0.0, %v1782
    %v1784 = vpop.f32.mrb[0].mxu0
    %v1785 = vpop.f32.mrb[0].mxu0
    %v1786 = vadd.f32 0.0, %v1785
    %v1787 = vpop.f32.mrb[0].mxu0
    %1788 = vmatprep.mubr.bf16.mxu0 %v427
    %1789 = vmatmul.mubr.bf16.gmra.mrb[0].mxu0 %v426
    %v1790 = vpop.f32.mrb[0].mxu0
    %v1791 = vadd.f32 0.0, %v1790
    %v1792 = vpop.f32.mrb[0].mxu0
    %v1793 = vpop.f32.mrb[0].mxu0
    %v1794 = vadd.f32 0.0, %v1793
    %v1795 = vpop.f32.mrb[0].mxu0
    %1796 = vmatprep.mubr.bf16.mxu0 %v429
    %1797 = vmatmul.mubr.bf16.gmra.mrb[0].mxu0 %v428
    %v1798 = vpop.f32.mrb[0].mxu0
    %v1799 = vadd.f32 0.0, %v1798
    %v1800 = vpop.f32.mrb[0].mxu0
    %v1801 = vpop.f32.mrb[0].mxu0
    %v1802 = vadd.f32 0.0, %v1801
    %v1803 = vpop.f32.mrb[0].mxu0
    %1804 = vmatprep.mubr.bf16.mxu0 %v431
    %1805 = vmatmul.mubr.bf16.gmra.mrb[0].mxu0 %v430
    %v1806 = vpop.f32.mrb[0].mxu0
    %v1807 = vadd.f32 0.0, %v1806
    %v1808 = vpop.f32.mrb[0].mxu0
    %v1809 = vpop.f32.mrb[0].mxu0
    %v1810 = vadd.f32 0.0, %v1809
    %v1811 = vpop.f32.mrb[0].mxu0
    %1812 = vmatprep.mubr.bf16.mxu0 %v433
    %1813 = vmatmul.mubr.bf16.gmra.mrb[0].mxu0 %v432
    %v1814 = vpop.f32.mrb[0].mxu0
    %v1815 = vadd.f32 0.0, %v1814
    %v1816 = vpop.f32.mrb[0].mxu0
    %v1817 = vpop.f32.mrb[0].mxu0
    %v1818 = vadd.f32 0.0, %v1817
    %v1819 = vpop.f32.mrb[0].mxu0
    %1820 = vmatprep.mubr.bf16.mxu0 %v435
    %1821 = vmatmul.mubr.bf16.gmra.mrb[0].mxu0 %v434
    %v1822 = vpop.f32.mrb[0].mxu0
    %v1823 = vadd.f32 0.0, %v1822
    %v1824 = vpop.f32.mrb[0].mxu0
    %v1825 = vpop.f32.mrb[0].mxu0
    %v1826 = vadd.f32 0.0, %v1825
    %v1827 = vpop.f32.mrb[0].mxu0
    %1828 = vmatprep.mubr.bf16.mxu0 %v437
    %1829 = vmatmul.mubr.bf16.gmra.mrb[0].mxu0 %v436
    %v1830 = vpop.f32.mrb[0].mxu0
    %v1831 = vadd.f32 0.0, %v1830
    %v1832 = vpop.f32.mrb[0].mxu0
    %v1833 = vpop.f32.mrb[0].mxu0
    %v1834 = vadd.f32 0.0, %v1833
    %v1835 = vpop.f32.mrb[0].mxu0
    %1836 = vmatprep.mubr.bf16.mxu0 %v439
    %1837 = vmatmul.mubr.bf16.gmra.mrb[0].mxu0 %v438
    %v1838 = vpop.f32.mrb[0].mxu0
    %v1839 = vadd.f32 0.0, %v1838
    %v1840 = vpop.f32.mrb[0].mxu0
    %v1841 = vpop.f32.mrb[0].mxu0
    %v1842 = vadd.f32 0.0, %v1841
    %v1843 = vpop.f32.mrb[0].mxu0
    %1844 = vmatprep.mubr.bf16.mxu0 %v441
    %1845 = vmatmul.mubr.bf16.gmra.mrb[0].mxu0 %v440
    %v1846 = vpop.f32.mrb[0].mxu0
    %v1847 = vadd.f32 0.0, %v1846
    %v1848 = vpop.f32.mrb[0].mxu0
    %v1849 = vpop.f32.mrb[0].mxu0
    %v1850 = vadd.f32 0.0, %v1849
    %v1851 = vpop.f32.mrb[0].mxu0
    %1852 = vmatprep.mubr.bf16.mxu0 %v443
    %1853 = vmatmul.mubr.bf16.gmra.mrb[0].mxu0 %v442
    %v1854 = vpop.f32.mrb[0].mxu0
    %v1855 = vadd.f32 0.0, %v1854
    %v1856 = vpop.f32.mrb[0].mxu0
    %v1857 = vpop.f32.mrb[0].mxu0
    %v1858 = vadd.f32 0.0, %v1857
    %v1859 = vpop.f32.mrb[0].mxu0
    %1860 = vmatprep.mubr.bf16.mxu0 %v445
    %1861 = vmatmul.mubr.bf16.gmra.mrb[0].mxu0 %v444
    %v1862 = vpop.f32.mrb[0].mxu0
    %v1863 = vadd.f32 0.0, %v1862
    %v1864 = vpop.f32.mrb[0].mxu0
    %v1865 = vpop.f32.mrb[0].mxu0
    %v1866 = vadd.f32 0.0, %v1865
    %v1867 = vpop.f32.mrb[0].mxu0
    %1868 = vmatprep.mubr.bf16.mxu0 %v447
    %1869 = vmatmul.mubr.bf16.gmra.mrb[0].mxu0 %v446
    %v1870 = vpop.f32.mrb[0].mxu0
    %v1871 = vadd.f32 0.0, %v1870
    %v1872 = vpop.f32.mrb[0].mxu0
    %v1873 = vpop.f32.mrb[0].mxu0
    %v1874 = vadd.f32 0.0, %v1873
    %v1875 = vpop.f32.mrb[0].mxu0
    %1876 = vmatprep.mubr.bf16.mxu0 %v449
    %1877 = vmatmul.mubr.bf16.gmra.mrb[0].mxu0 %v448
    %v1878 = vpop.f32.mrb[0].mxu0
    %v1879 = vadd.f32 0.0, %v1878
    %v1880 = vpop.f32.mrb[0].mxu0
    %v1881 = vpop.f32.mrb[0].mxu0
    %v1882 = vadd.f32 0.0, %v1881
    %v1883 = vpop.f32.mrb[0].mxu0
    %1884 = vmatprep.mubr.bf16.mxu0 %v451
    %1885 = vmatmul.mubr.bf16.gmra.mrb[0].mxu0 %v450
    %v1886 = vpop.f32.mrb[0].mxu0
    %v1887 = vadd.f32 0.0, %v1886
    %v1888 = vpop.f32.mrb[0].mxu0
    %v1889 = vpop.f32.mrb[0].mxu0
    %v1890 = vadd.f32 0.0, %v1889
    %v1891 = vpop.f32.mrb[0].mxu0
    %1892 = vmatprep.mubr.bf16.mxu0 %v453
    %1893 = vmatmul.mubr.bf16.gmra.mrb[0].mxu0 %v452
    %v1894 = vpop.f32.mrb[0].mxu0
    %v1895 = vadd.f32 0.0, %v1894
    %v1896 = vpop.f32.mrb[0].mxu0
    %v1897 = vpop.f32.mrb[0].mxu0
    %v1898 = vadd.f32 0.0, %v1897
    %v1899 = vpop.f32.mrb[0].mxu0
    %1900 = vdwg.mxu0
    %v1901 = vmul.f32 %v1775, 0.01
    %v1902 = vmul.f32 %v1778, 0.01
    %v1903 = vmul.f32 %v1783, 0.01
    %v1904 = vmul.f32 %v1786, 0.01
    %v1905 = vmul.f32 %v1791, 0.01
    %v1906 = vmul.f32 %v1794, 0.01
    %v1907 = vmul.f32 %v1799, 0.01
    %v1908 = vmul.f32 %v1802, 0.01
    %v1909 = vmul.f32 %v1807, 0.01
    %v1910 = vmul.f32 %v1810, 0.01
    %v1911 = vmul.f32 %v1815, 0.01
    %v1912 = vmul.f32 %v1818, 0.01
    %v1913 = vmul.f32 %v1823, 0.01
    %v1914 = vmul.f32 %v1826, 0.01
    %v1915 = vmul.f32 %v1831, 0.01
    %v1916 = vmul.f32 %v1834, 0.01
    %v1917 = vmul.f32 %v1839, 0.01
    %v1918 = vmul.f32 %v1842, 0.01
    %v1919 = vmul.f32 %v1847, 0.01
    %v1920 = vmul.f32 %v1850, 0.01
    %v1921 = vmul.f32 %v1855, 0.01
    %v1922 = vmul.f32 %v1858, 0.01
    %v1923 = vmul.f32 %v1863, 0.01
    %v1924 = vmul.f32 %v1866, 0.01
    %v1925 = vmul.f32 %v1871, 0.01
    %v1926 = vmul.f32 %v1874, 0.01
    %v1927 = vmul.f32 %v1879, 0.01
    %v1928 = vmul.f32 %v1882, 0.01
    %v1929 = vmul.f32 %v1887, 0.01
    %v1930 = vmul.f32 %v1890, 0.01
    %v1931 = vmul.f32 %v1895, 0.01
    %v1932 = vmul.f32 %v1898, 0.01
    %v1933 = vmax.f32 %v1775, %v1901
    %v1934 = vmax.f32 %v1778, %v1902
    %v1935 = vmax.f32 %v1783, %v1903
    %v1936 = vmax.f32 %v1786, %v1904
    %v1937 = vmax.f32 %v1791, %v1905
    %v1938 = vmax.f32 %v1794, %v1906
    %v1939 = vmax.f32 %v1799, %v1907
    %v1940 = vmax.f32 %v1802, %v1908
    %v1941 = vmax.f32 %v1807, %v1909
    %v1942 = vmax.f32 %v1810, %v1910
    %v1943 = vmax.f32 %v1815, %v1911
    %v1944 = vmax.f32 %v1818, %v1912
    %v1945 = vmax.f32 %v1823, %v1913
    %v1946 = vmax.f32 %v1826, %v1914
    %v1947 = vmax.f32 %v1831, %v1915
    %v1948 = vmax.f32 %v1834, %v1916
    %v1949 = vmax.f32 %v1839, %v1917
    %v1950 = vmax.f32 %v1842, %v1918
    %v1951 = vmax.f32 %v1847, %v1919
    %v1952 = vmax.f32 %v1850, %v1920
    %v1953 = vmax.f32 %v1855, %v1921
    %v1954 = vmax.f32 %v1858, %v1922
    %v1955 = vmax.f32 %v1863, %v1923
    %v1956 = vmax.f32 %v1866, %v1924
    %v1957 = vmax.f32 %v1871, %v1925
    %v1958 = vmax.f32 %v1874, %v1926
    %v1959 = vmax.f32 %v1879, %v1927
    %v1960 = vmax.f32 %v1882, %v1928
    %v1961 = vmax.f32 %v1887, %v1929
    %v1962 = vmax.f32 %v1890, %v1930
    %v1963 = vmax.f32 %v1895, %v1931
    %v1964 = vmax.f32 %v1898, %v1932
    %v1965 = vpack.c.bf16 %v1934, %v1933
    %v1966 = vpack.c.bf16 %v1936, %v1935
    %v1967 = vpack.c.bf16 %v1938, %v1937
    %v1968 = vpack.c.bf16 %v1940, %v1939
    %v1969 = vpack.c.bf16 %v1942, %v1941
    %v1970 = vpack.c.bf16 %v1944, %v1943
    %v1971 = vpack.c.bf16 %v1946, %v1945
    %v1972 = vpack.c.bf16 %v1948, %v1947
    %v1973 = vpack.c.bf16 %v1950, %v1949
    %v1974 = vpack.c.bf16 %v1952, %v1951
    %v1975 = vpack.c.bf16 %v1954, %v1953
    %v1976 = vpack.c.bf16 %v1956, %v1955
    %v1977 = vpack.c.bf16 %v1958, %v1957
    %v1978 = vpack.c.bf16 %v1960, %v1959
    %v1979 = vpack.c.bf16 %v1962, %v1961
    %v1980 = vpack.c.bf16 %v1964, %v1963
    %1981 = vmatprep.subr.bf16.mxu0 0
    %1982 = vmatpush1.bf16.msra.mxu0 %v173
    %1983 = vmatprep.subr.bf16.mxu0 0
    %1984 = vmatpush1.bf16.msra.mxu0 %v174
    %1985 = vmatprep.subr.bf16.mxu0 0
    %1986 = vmatpush1.bf16.msra.mxu0 %v175
    %1987 = vmatprep.subr.bf16.mxu0 0
    %1988 = vmatpush1.bf16.msra.mxu0 %v176
    %1989 = vmatprep.subr.bf16.mxu0 0
    %1990 = vmatpush1.bf16.msra.mxu0 %v177
    %1991 = vmatprep.subr.bf16.mxu0 0
    %1992 = vmatpush1.bf16.msra.mxu0 %v178
    %1993 = vmatprep.subr.bf16.mxu0 0
    %1994 = vmatpush1.bf16.msra.mxu0 %v179
    %1995 = vmatprep.subr.bf16.mxu0 0
    %1996 = vmatpush1.bf16.msra.mxu0 %v180
    %1997 = vmatprep.subr.bf16.mxu0 0
    %1998 = vmatpush1.bf16.msra.mxu0 0
    %1999 = vmatprep.subr.bf16.mxu0 0
    %2000 = vmatpush1.bf16.msra.mxu0 0
    %2001 = vmatprep.subr.bf16.mxu0 0
    %2002 = vmatpush1.bf16.msra.mxu0 0
    %2003 = vmatprep.subr.bf16.mxu0 0
    %2004 = vmatpush1.bf16.msra.mxu0 0
    %2005 = vmatprep.subr.bf16.mxu0 0
    %2006 = vmatpush1.bf16.msra.mxu0 0
    %2007 = vmatprep.subr.bf16.mxu0 0
    %2008 = vmatpush1.bf16.msra.mxu0 0
    %2009 = vmatprep.subr.bf16.mxu0 0
    %2010 = vmatpush1.bf16.msra.mxu0 0
    %2011 = vmatprep.subr.bf16.mxu0 0
    %2012 = vmatpush1.bf16.msra.mxu0 0
    %2013 = vmatprep.mubr.bf16.mxu0 0
    %2014 = vmatmul.mubr.bf16.gmra.mrb[0].mxu0 %v1965
    %v2015 = vpop.f32.mrb[0].mxu0
    %v2016 = vadd.f32 0.0, %v2015
    %v2017 = vpop.f32.mrb[0].mxu0
    %v2018 = vpop.f32.mrb[0].mxu0
    %v2019 = vadd.f32 0.0, %v2018
    %v2020 = vpop.f32.mrb[0].mxu0
    %2021 = vmatprep.mubr.bf16.mxu0 0
    %2022 = vmatmul.mubr.bf16.gmra.mrb[0].mxu0 %v1966
    %v2023 = vpop.f32.mrb[0].mxu0
    %v2024 = vadd.f32 0.0, %v2023
    %v2025 = vpop.f32.mrb[0].mxu0
    %v2026 = vpop.f32.mrb[0].mxu0
    %v2027 = vadd.f32 0.0, %v2026
    %v2028 = vpop.f32.mrb[0].mxu0
    %2029 = vmatprep.mubr.bf16.mxu0 0
    %2030 = vmatmul.mubr.bf16.gmra.mrb[0].mxu0 %v1967
    %v2031 = vpop.f32.mrb[0].mxu0
    %v2032 = vadd.f32 0.0, %v2031
    %v2033 = vpop.f32.mrb[0].mxu0
    %v2034 = vpop.f32.mrb[0].mxu0
    %v2035 = vadd.f32 0.0, %v2034
    %v2036 = vpop.f32.mrb[0].mxu0
    %2037 = vmatprep.mubr.bf16.mxu0 0
    %2038 = vmatmul.mubr.bf16.gmra.mrb[0].mxu0 %v1968
    %v2039 = vpop.f32.mrb[0].mxu0
    %v2040 = vadd.f32 0.0, %v2039
    %v2041 = vpop.f32.mrb[0].mxu0
    %v2042 = vpop.f32.mrb[0].mxu0
    %v2043 = vadd.f32 0.0, %v2042
    %v2044 = vpop.f32.mrb[0].mxu0
    %2045 = vmatprep.mubr.bf16.mxu0 0
    %2046 = vmatmul.mubr.bf16.gmra.mrb[0].mxu0 %v1969
    %v2047 = vpop.f32.mrb[0].mxu0
    %v2048 = vadd.f32 0.0, %v2047
    %v2049 = vpop.f32.mrb[0].mxu0
    %v2050 = vpop.f32.mrb[0].mxu0
    %v2051 = vadd.f32 0.0, %v2050
    %v2052 = vpop.f32.mrb[0].mxu0
    %2053 = vmatprep.mubr.bf16.mxu0 0
    %2054 = vmatmul.mubr.bf16.gmra.mrb[0].mxu0 %v1970
    %v2055 = vpop.f32.mrb[0].mxu0
    %v2056 = vadd.f32 0.0, %v2055
    %v2057 = vpop.f32.mrb[0].mxu0
    %v2058 = vpop.f32.mrb[0].mxu0
    %v2059 = vadd.f32 0.0, %v2058
    %v2060 = vpop.f32.mrb[0].mxu0
    %2061 = vmatprep.mubr.bf16.mxu0 0
    %2062 = vmatmul.mubr.bf16.gmra.mrb[0].mxu0 %v1971
    %v2063 = vpop.f32.mrb[0].mxu0
    %v2064 = vadd.f32 0.0, %v2063
    %v2065 = vpop.f32.mrb[0].mxu0
    %v2066 = vpop.f32.mrb[0].mxu0
    %v2067 = vadd.f32 0.0, %v2066
    %v2068 = vpop.f32.mrb[0].mxu0
    %2069 = vmatprep.mubr.bf16.mxu0 0
    %2070 = vmatmul.mubr.bf16.gmra.mrb[0].mxu0 %v1972
    %v2071 = vpop.f32.mrb[0].mxu0
    %v2072 = vadd.f32 0.0, %v2071
    %v2073 = vpop.f32.mrb[0].mxu0
    %v2074 = vpop.f32.mrb[0].mxu0
    %v2075 = vadd.f32 0.0, %v2074
    %v2076 = vpop.f32.mrb[0].mxu0
    %2077 = vmatprep.mubr.bf16.mxu0 0
    %2078 = vmatmul.mubr.bf16.gmra.mrb[0].mxu0 %v1973
    %v2079 = vpop.f32.mrb[0].mxu0
    %v2080 = vadd.f32 0.0, %v2079
    %v2081 = vpop.f32.mrb[0].mxu0
    %v2082 = vpop.f32.mrb[0].mxu0
    %v2083 = vadd.f32 0.0, %v2082
    %v2084 = vpop.f32.mrb[0].mxu0
    %2085 = vmatprep.mubr.bf16.mxu0 0
    %2086 = vmatmul.mubr.bf16.gmra.mrb[0].mxu0 %v1974
    %v2087 = vpop.f32.mrb[0].mxu0
    %v2088 = vadd.f32 0.0, %v2087
    %v2089 = vpop.f32.mrb[0].mxu0
    %v2090 = vpop.f32.mrb[0].mxu0
    %v2091 = vadd.f32 0.0, %v2090
    %v2092 = vpop.f32.mrb[0].mxu0
    %2093 = vmatprep.mubr.bf16.mxu0 0
    %2094 = vmatmul.mubr.bf16.gmra.mrb[0].mxu0 %v1975
    %v2095 = vpop.f32.mrb[0].mxu0
    %v2096 = vadd.f32 0.0, %v2095
    %v2097 = vpop.f32.mrb[0].mxu0
    %v2098 = vpop.f32.mrb[0].mxu0
    %v2099 = vadd.f32 0.0, %v2098
    %v2100 = vpop.f32.mrb[0].mxu0
    %2101 = vmatprep.mubr.bf16.mxu0 0
    %2102 = vmatmul.mubr.bf16.gmra.mrb[0].mxu0 %v1976
    %v2103 = vpop.f32.mrb[0].mxu0
    %v2104 = vadd.f32 0.0, %v2103
    %v2105 = vpop.f32.mrb[0].mxu0
    %v2106 = vpop.f32.mrb[0].mxu0
    %v2107 = vadd.f32 0.0, %v2106
    %v2108 = vpop.f32.mrb[0].mxu0
    %2109 = vmatprep.mubr.bf16.mxu0 0
    %2110 = vmatmul.mubr.bf16.gmra.mrb[0].mxu0 %v1977
    %v2111 = vpop.f32.mrb[0].mxu0
    %v2112 = vadd.f32 0.0, %v2111
    %v2113 = vpop.f32.mrb[0].mxu0
    %v2114 = vpop.f32.mrb[0].mxu0
    %v2115 = vadd.f32 0.0, %v2114
    %v2116 = vpop.f32.mrb[0].mxu0
    %2117 = vmatprep.mubr.bf16.mxu0 0
    %2118 = vmatmul.mubr.bf16.gmra.mrb[0].mxu0 %v1978
    %v2119 = vpop.f32.mrb[0].mxu0
    %v2120 = vadd.f32 0.0, %v2119
    %v2121 = vpop.f32.mrb[0].mxu0
    %v2122 = vpop.f32.mrb[0].mxu0
    %v2123 = vadd.f32 0.0, %v2122
    %v2124 = vpop.f32.mrb[0].mxu0
    %2125 = vmatprep.mubr.bf16.mxu0 0
    %2126 = vmatmul.mubr.bf16.gmra.mrb[0].mxu0 %v1979
    %v2127 = vpop.f32.mrb[0].mxu0
    %v2128 = vadd.f32 0.0, %v2127
    %v2129 = vpop.f32.mrb[0].mxu0
    %v2130 = vpop.f32.mrb[0].mxu0
    %v2131 = vadd.f32 0.0, %v2130
    %v2132 = vpop.f32.mrb[0].mxu0
    %2133 = vmatprep.mubr.bf16.mxu0 0
    %2134 = vmatmul.mubr.bf16.gmra.mrb[0].mxu0 %v1980
    %v2135 = vpop.f32.mrb[0].mxu0
    %v2136 = vadd.f32 0.0, %v2135
    %v2137 = vpop.f32.mrb[0].mxu0
    %v2138 = vpop.f32.mrb[0].mxu0
    %v2139 = vadd.f32 0.0, %v2138
    %v2140 = vpop.f32.mrb[0].mxu0
    %2141 = vdwg.mxu0
    %v2142 = vpack.c.bf16 %v2019, %v2016
    %v2143 = vpack.c.bf16 %v2027, %v2024
    %v2144 = vpack.c.bf16 %v2035, %v2032
    %v2145 = vpack.c.bf16 %v2043, %v2040
    %v2146 = vpack.c.bf16 %v2051, %v2048
    %v2147 = vpack.c.bf16 %v2059, %v2056
    %v2148 = vpack.c.bf16 %v2067, %v2064
    %v2149 = vpack.c.bf16 %v2075, %v2072
    %v2150 = vpack.c.bf16 %v2083, %v2080
    %v2151 = vpack.c.bf16 %v2091, %v2088
    %v2152 = vpack.c.bf16 %v2099, %v2096
    %v2153 = vpack.c.bf16 %v2107, %v2104
    %v2154 = vpack.c.bf16 %v2115, %v2112
    %v2155 = vpack.c.bf16 %v2123, %v2120
    %v2156 = vpack.c.bf16 %v2131, %v2128
    %v2157 = vpack.c.bf16 %v2139, %v2136
    %2158 = vmatprep.subr.bf16.mxu0 0
    %2159 = vmatpush1.bf16.msra.mxu0 %v2142
    %2160 = vmatprep.subr.bf16.mxu0 0
    %2161 = vmatpush1.bf16.msra.mxu0 %v2143
    %2162 = vmatprep.subr.bf16.mxu0 0
    %2163 = vmatpush1.bf16.msra.mxu0 %v2144
    %2164 = vmatprep.subr.bf16.mxu0 0
    %2165 = vmatpush1.bf16.msra.mxu0 %v2145
    %2166 = vmatprep.subr.bf16.mxu0 0
    %2167 = vmatpush1.bf16.msra.mxu0 %v2146
    %2168 = vmatprep.subr.bf16.mxu0 0
    %2169 = vmatpush1.bf16.msra.mxu0 %v2147
    %2170 = vmatprep.subr.bf16.mxu0 0
    %2171 = vmatpush1.bf16.msra.mxu0 %v2148
    %2172 = vmatprep.subr.bf16.mxu0 0
    %2173 = vmatpush1.bf16.msra.mxu0 %v2149
    %2174 = vmatprep.subr.bf16.mxu0 0
    %2175 = vmatpush1.bf16.msra.mxu0 %v2150
    %2176 = vmatprep.subr.bf16.mxu0 0
    %2177 = vmatpush1.bf16.msra.mxu0 %v2151
    %2178 = vmatprep.subr.bf16.mxu0 0
    %2179 = vmatpush1.bf16.msra.mxu0 %v2152
    %2180 = vmatprep.subr.bf16.mxu0 0
    %2181 = vmatpush1.bf16.msra.mxu0 %v2153
    %2182 = vmatprep.subr.bf16.mxu0 0
    %2183 = vmatpush1.bf16.msra.mxu0 %v2154
    %2184 = vmatprep.subr.bf16.mxu0 0
    %2185 = vmatpush1.bf16.msra.mxu0 %v2155
    %2186 = vmatprep.subr.bf16.mxu0 0
    %2187 = vmatpush1.bf16.msra.mxu0 %v2156
    %2188 = vmatprep.subr.bf16.mxu0 0
    %2189 = vmatpush1.bf16.msra.mxu0 %v2157
    %2190 = vmatprep.mubr.bf16.mxu0 %v423
    %2191 = vmatmul.mubr.bf16.gmra.mrb[0].mxu0 %v422
    %v2192 = vpop.f32.mrb[0].mxu0
    %v2193 = vadd.f32 0.0, %v2192
    %v2194 = vpop.f32.mrb[0].mxu0
    %v2195 = vpop.f32.mrb[0].mxu0
    %v2196 = vadd.f32 0.0, %v2195
    %v2197 = vpop.f32.mrb[0].mxu0
    %2198 = vmatprep.mubr.bf16.mxu0 %v425
    %2199 = vmatmul.mubr.bf16.gmra.mrb[0].mxu0 %v424
    %v2200 = vpop.f32.mrb[0].mxu0
    %v2201 = vadd.f32 0.0, %v2200
    %v2202 = vpop.f32.mrb[0].mxu0
    %v2203 = vpop.f32.mrb[0].mxu0
    %v2204 = vadd.f32 0.0, %v2203
    %v2205 = vpop.f32.mrb[0].mxu0
    %2206 = vmatprep.mubr.bf16.mxu0 %v427
    %2207 = vmatmul.mubr.bf16.gmra.mrb[0].mxu0 %v426
    %v2208 = vpop.f32.mrb[0].mxu0
    %v2209 = vadd.f32 0.0, %v2208
    %v2210 = vpop.f32.mrb[0].mxu0
    %v2211 = vpop.f32.mrb[0].mxu0
    %v2212 = vadd.f32 0.0, %v2211
    %v2213 = vpop.f32.mrb[0].mxu0
    %2214 = vmatprep.mubr.bf16.mxu0 %v429
    %2215 = vmatmul.mubr.bf16.gmra.mrb[0].mxu0 %v428
    %v2216 = vpop.f32.mrb[0].mxu0
    %v2217 = vadd.f32 0.0, %v2216
    %v2218 = vpop.f32.mrb[0].mxu0
    %v2219 = vpop.f32.mrb[0].mxu0
    %v2220 = vadd.f32 0.0, %v2219
    %v2221 = vpop.f32.mrb[0].mxu0
    %2222 = vmatprep.mubr.bf16.mxu0 %v431
    %2223 = vmatmul.mubr.bf16.gmra.mrb[0].mxu0 %v430
    %v2224 = vpop.f32.mrb[0].mxu0
    %v2225 = vadd.f32 0.0, %v2224
    %v2226 = vpop.f32.mrb[0].mxu0
    %v2227 = vpop.f32.mrb[0].mxu0
    %v2228 = vadd.f32 0.0, %v2227
    %v2229 = vpop.f32.mrb[0].mxu0
    %2230 = vmatprep.mubr.bf16.mxu0 %v433
    %2231 = vmatmul.mubr.bf16.gmra.mrb[0].mxu0 %v432
    %v2232 = vpop.f32.mrb[0].mxu0
    %v2233 = vadd.f32 0.0, %v2232
    %v2234 = vpop.f32.mrb[0].mxu0
    %v2235 = vpop.f32.mrb[0].mxu0
    %v2236 = vadd.f32 0.0, %v2235
    %v2237 = vpop.f32.mrb[0].mxu0
    %2238 = vmatprep.mubr.bf16.mxu0 %v435
    %2239 = vmatmul.mubr.bf16.gmra.mrb[0].mxu0 %v434
    %v2240 = vpop.f32.mrb[0].mxu0
    %v2241 = vadd.f32 0.0, %v2240
    %v2242 = vpop.f32.mrb[0].mxu0
    %v2243 = vpop.f32.mrb[0].mxu0
    %v2244 = vadd.f32 0.0, %v2243
    %v2245 = vpop.f32.mrb[0].mxu0
    %2246 = vmatprep.mubr.bf16.mxu0 %v437
    %2247 = vmatmul.mubr.bf16.gmra.mrb[0].mxu0 %v436
    %v2248 = vpop.f32.mrb[0].mxu0
    %v2249 = vadd.f32 0.0, %v2248
    %v2250 = vpop.f32.mrb[0].mxu0
    %v2251 = vpop.f32.mrb[0].mxu0
    %v2252 = vadd.f32 0.0, %v2251
    %v2253 = vpop.f32.mrb[0].mxu0
    %2254 = vmatprep.mubr.bf16.mxu0 %v439
    %2255 = vmatmul.mubr.bf16.gmra.mrb[0].mxu0 %v438
    %v2256 = vpop.f32.mrb[0].mxu0
    %v2257 = vadd.f32 0.0, %v2256
    %v2258 = vpop.f32.mrb[0].mxu0
    %v2259 = vpop.f32.mrb[0].mxu0
    %v2260 = vadd.f32 0.0, %v2259
    %v2261 = vpop.f32.mrb[0].mxu0
    %2262 = vmatprep.mubr.bf16.mxu0 %v441
    %2263 = vmatmul.mubr.bf16.gmra.mrb[0].mxu0 %v440
    %v2264 = vpop.f32.mrb[0].mxu0
    %v2265 = vadd.f32 0.0, %v2264
    %v2266 = vpop.f32.mrb[0].mxu0
    %v2267 = vpop.f32.mrb[0].mxu0
    %v2268 = vadd.f32 0.0, %v2267
    %v2269 = vpop.f32.mrb[0].mxu0
    %2270 = vmatprep.mubr.bf16.mxu0 %v443
    %2271 = vmatmul.mubr.bf16.gmra.mrb[0].mxu0 %v442
    %v2272 = vpop.f32.mrb[0].mxu0
    %v2273 = vadd.f32 0.0, %v2272
    %v2274 = vpop.f32.mrb[0].mxu0
    %v2275 = vpop.f32.mrb[0].mxu0
    %v2276 = vadd.f32 0.0, %v2275
    %v2277 = vpop.f32.mrb[0].mxu0
    %2278 = vmatprep.mubr.bf16.mxu0 %v445
    %2279 = vmatmul.mubr.bf16.gmra.mrb[0].mxu0 %v444
    %v2280 = vpop.f32.mrb[0].mxu0
    %v2281 = vadd.f32 0.0, %v2280
    %v2282 = vpop.f32.mrb[0].mxu0
    %v2283 = vpop.f32.mrb[0].mxu0
    %v2284 = vadd.f32 0.0, %v2283
    %v2285 = vpop.f32.mrb[0].mxu0
    %2286 = vmatprep.mubr.bf16.mxu0 %v447
    %2287 = vmatmul.mubr.bf16.gmra.mrb[0].mxu0 %v446
    %v2288 = vpop.f32.mrb[0].mxu0
    %v2289 = vadd.f32 0.0, %v2288
    %v2290 = vpop.f32.mrb[0].mxu0
    %v2291 = vpop.f32.mrb[0].mxu0
    %v2292 = vadd.f32 0.0, %v2291
    %v2293 = vpop.f32.mrb[0].mxu0
    %2294 = vmatprep.mubr.bf16.mxu0 %v449
    %2295 = vmatmul.mubr.bf16.gmra.mrb[0].mxu0 %v448
    %v2296 = vpop.f32.mrb[0].mxu0
    %v2297 = vadd.f32 0.0, %v2296
    %v2298 = vpop.f32.mrb[0].mxu0
    %v2299 = vpop.f32.mrb[0].mxu0
    %v2300 = vadd.f32 0.0, %v2299
    %v2301 = vpop.f32.mrb[0].mxu0
    %2302 = vmatprep.mubr.bf16.mxu0 %v451
    %2303 = vmatmul.mubr.bf16.gmra.mrb[0].mxu0 %v450
    %v2304 = vpop.f32.mrb[0].mxu0
    %v2305 = vadd.f32 0.0, %v2304
    %v2306 = vpop.f32.mrb[0].mxu0
    %v2307 = vpop.f32.mrb[0].mxu0
    %v2308 = vadd.f32 0.0, %v2307
    %v2309 = vpop.f32.mrb[0].mxu0
    %2310 = vmatprep.mubr.bf16.mxu0 %v453
    %2311 = vmatmul.mubr.bf16.gmra.mrb[0].mxu0 %v452
    %v2312 = vpop.f32.mrb[0].mxu0
    %v2313 = vadd.f32 0.0, %v2312
    %v2314 = vpop.f32.mrb[0].mxu0
    %v2315 = vpop.f32.mrb[0].mxu0
    %v2316 = vadd.f32 0.0, %v2315
    %v2317 = vpop.f32.mrb[0].mxu0
    %2318 = vdwg.mxu0
    %2319 = vst [vmem:[#allocation8] sm:$0xff] %v2193
    %2320 = vst [vmem:[#allocation8 + $0x8] sm:$0xff] %v2196
    %2321 = vst [vmem:[#allocation8 + $0x10] sm:$0xff] %v2201
    %2322 = vst [vmem:[#allocation8 + $0x18] sm:$0xff] %v2204
    %2323 = vst [vmem:[#allocation8 + $0x20] sm:$0xff] %v2209
    %2324 = vst [vmem:[#allocation8 + $0x28] sm:$0xff] %v2212
    %2325 = vst [vmem:[#allocation8 + $0x30] sm:$0xff] %v2217
    %2326 = vst [vmem:[#allocation8 + $0x38] sm:$0xff] %v2220
    %2327 = vst [vmem:[#allocation8 + $0x40] sm:$0xff] %v2225
    %2328 = vst [vmem:[#allocation8 + $0x48] sm:$0xff] %v2228
    %2329 = vst [vmem:[#allocation8 + $0x50] sm:$0xff] %v2233
    %2330 = vst [vmem:[#allocation8 + $0x58] sm:$0xff] %v2236
    %2331 = vst [vmem:[#allocation8 + $0x60] sm:$0xff] %v2241
    %2332 = vst [vmem:[#allocation8 + $0x68] sm:$0xff] %v2244
    %2333 = vst [vmem:[#allocation8 + $0x70] sm:$0xff] %v2249
    %2334 = vst [vmem:[#allocation8 + $0x78] sm:$0xff] %v2252
    %2335 = vst [vmem:[#allocation9] sm:$0xff] %v2257
    %2336 = vst [vmem:[#allocation9 + $0x8] sm:$0xff] %v2260
    %2337 = vst [vmem:[#allocation9 + $0x10] sm:$0xff] %v2265
    %2338 = vst [vmem:[#allocation9 + $0x18] sm:$0xff] %v2268
    %2339 = vst [vmem:[#allocation9 + $0x20] sm:$0xff] %v2273
    %2340 = vst [vmem:[#allocation9 + $0x28] sm:$0xff] %v2276
    %2341 = vst [vmem:[#allocation9 + $0x30] sm:$0xff] %v2281
    %2342 = vst [vmem:[#allocation9 + $0x38] sm:$0xff] %v2284
    %2343 = vst [vmem:[#allocation9 + $0x40] sm:$0xff] %v2289
    %2344 = vst [vmem:[#allocation9 + $0x48] sm:$0xff] %v2292
    %2345 = vst [vmem:[#allocation9 + $0x50] sm:$0xff] %v2297
    %2346 = vst [vmem:[#allocation9 + $0x58] sm:$0xff] %v2300
    %2347 = vst [vmem:[#allocation9 + $0x60] sm:$0xff] %v2305
    %2348 = vst [vmem:[#allocation9 + $0x68] sm:$0xff] %v2308
    %2349 = vst [vmem:[#allocation9 + $0x70] sm:$0xff] %v2313
    %2350 = vst [vmem:[#allocation9 + $0x78] sm:$0xff] %v2316
    %v2351 = vpack.c.bf16 %v2196, %v2193
    %v2352 = vpack.c.bf16 %v2204, %v2201
    %v2353 = vpack.c.bf16 %v2212, %v2209
    %v2354 = vpack.c.bf16 %v2220, %v2217
    %v2355 = vpack.c.bf16 %v2228, %v2225
    %v2356 = vpack.c.bf16 %v2236, %v2233
    %v2357 = vpack.c.bf16 %v2244, %v2241
    %v2358 = vpack.c.bf16 %v2252, %v2249
    %v2359 = vpack.c.bf16 %v2260, %v2257
    %v2360 = vpack.c.bf16 %v2268, %v2265
    %v2361 = vpack.c.bf16 %v2276, %v2273
    %v2362 = vpack.c.bf16 %v2284, %v2281
    %v2363 = vpack.c.bf16 %v2292, %v2289
    %v2364 = vpack.c.bf16 %v2300, %v2297
    %v2365 = vpack.c.bf16 %v2308, %v2305
    %v2366 = vpack.c.bf16 %v2316, %v2313
    %2367 = vxpose.xlu0.c.b16.start [1/8] %v2351, 128
    %2368 = vxpose.xlu0.c.b16.cont [2/8] %v2352, 128
    %2369 = vxpose.xlu0.c.b16.cont [3/8] %v2353, 128
    %2370 = vxpose.xlu0.c.b16.cont [4/8] %v2354, 128
    %2371 = vxpose.xlu0.c.b16.cont [5/8] %v2355, 128
    %2372 = vxpose.xlu0.c.b16.cont [6/8] %v2356, 128
    %2373 = vxpose.xlu0.c.b16.cont [7/8] %v2357, 128
    %2374 = vxpose.xlu0.c.b16.end [8/8] %v2358, 128
    %v2375 = vpop.trf.xlu0
    %v2376 = vpop.trf.xlu0
    %v2377 = vpop.trf.xlu0
    %v2378 = vpop.trf.xlu0
    %v2379 = vpop.trf.xlu0
    %v2380 = vpop.trf.xlu0
    %v2381 = vpop.trf.xlu0
    %v2382 = vpop.trf.xlu0
    %2383 = vmatprep.subr.bf16.mxu0 0
    %2384 = vmatpush1.bf16.msra.mxu0 %v2359
    %2385 = vmatprep.subr.bf16.mxu0 0
    %2386 = vmatpush1.bf16.msra.mxu0 %v2360
    %2387 = vmatprep.subr.bf16.mxu0 0
    %2388 = vmatpush1.bf16.msra.mxu0 %v2361
    %2389 = vmatprep.subr.bf16.mxu0 0
    %2390 = vmatpush1.bf16.msra.mxu0 %v2362
    %2391 = vmatprep.subr.bf16.mxu0 0
    %2392 = vmatpush1.bf16.msra.mxu0 %v2363
    %2393 = vmatprep.subr.bf16.mxu0 0
    %2394 = vmatpush1.bf16.msra.mxu0 %v2364
    %2395 = vmatprep.subr.bf16.mxu0 0
    %2396 = vmatpush1.bf16.msra.mxu0 %v2365
    %2397 = vmatprep.subr.bf16.mxu0 0
    %2398 = vmatpush1.bf16.msra.mxu0 %v2366
    %2399 = vmatprep.subr.bf16.mxu0 0
    %2400 = vmatpush1.bf16.msra.mxu0 0
    %2401 = vmatprep.subr.bf16.mxu0 0
    %2402 = vmatpush1.bf16.msra.mxu0 0
    %2403 = vmatprep.subr.bf16.mxu0 0
    %2404 = vmatpush1.bf16.msra.mxu0 0
    %2405 = vmatprep.subr.bf16.mxu0 0
    %2406 = vmatpush1.bf16.msra.mxu0 0
    %2407 = vmatprep.subr.bf16.mxu0 0
    %2408 = vmatpush1.bf16.msra.mxu0 0
    %2409 = vmatprep.subr.bf16.mxu0 0
    %2410 = vmatpush1.bf16.msra.mxu0 0
    %2411 = vmatprep.subr.bf16.mxu0 0
    %2412 = vmatpush1.bf16.msra.mxu0 0
    %2413 = vmatprep.subr.bf16.mxu0 0
    %2414 = vmatpush1.bf16.msra.mxu0 0
    %2415 = vmatprep.mubr.bf16.mxu0 0
    %2416 = vmatmul.mubr.bf16.gmra.mrb[0].mxu0 %v2375
    %v2417 = vpop.f32.mrb[0].mxu0
    %v2418 = vadd.f32 0.0, %v2417
    %v2419 = vpop.f32.mrb[0].mxu0
    %v2420 = vpop.f32.mrb[0].mxu0
    %v2421 = vadd.f32 0.0, %v2420
    %v2422 = vpop.f32.mrb[0].mxu0
    %2423 = vmatprep.mubr.bf16.mxu0 0
    %2424 = vmatmul.mubr.bf16.gmra.mrb[0].mxu0 %v2376
    %v2425 = vpop.f32.mrb[0].mxu0
    %v2426 = vadd.f32 0.0, %v2425
    %v2427 = vpop.f32.mrb[0].mxu0
    %v2428 = vpop.f32.mrb[0].mxu0
    %v2429 = vadd.f32 0.0, %v2428
    %v2430 = vpop.f32.mrb[0].mxu0
    %2431 = vmatprep.mubr.bf16.mxu0 0
    %2432 = vmatmul.mubr.bf16.gmra.mrb[0].mxu0 %v2377
    %v2433 = vpop.f32.mrb[0].mxu0
    %v2434 = vadd.f32 0.0, %v2433
    %v2435 = vpop.f32.mrb[0].mxu0
    %v2436 = vpop.f32.mrb[0].mxu0
    %v2437 = vadd.f32 0.0, %v2436
    %v2438 = vpop.f32.mrb[0].mxu0
    %2439 = vmatprep.mubr.bf16.mxu0 0
    %2440 = vmatmul.mubr.bf16.gmra.mrb[0].mxu0 %v2378
    %v2441 = vpop.f32.mrb[0].mxu0
    %v2442 = vadd.f32 0.0, %v2441
    %v2443 = vpop.f32.mrb[0].mxu0
    %v2444 = vpop.f32.mrb[0].mxu0
    %v2445 = vadd.f32 0.0, %v2444
    %v2446 = vpop.f32.mrb[0].mxu0
    %2447 = vmatprep.mubr.bf16.mxu0 0
    %2448 = vmatmul.mubr.bf16.gmra.mrb[0].mxu0 %v2379
    %v2449 = vpop.f32.mrb[0].mxu0
    %v2450 = vadd.f32 0.0, %v2449
    %v2451 = vpop.f32.mrb[0].mxu0
    %v2452 = vpop.f32.mrb[0].mxu0
    %v2453 = vadd.f32 0.0, %v2452
    %v2454 = vpop.f32.mrb[0].mxu0
    %2455 = vmatprep.mubr.bf16.mxu0 0
    %2456 = vmatmul.mubr.bf16.gmra.mrb[0].mxu0 %v2380
    %v2457 = vpop.f32.mrb[0].mxu0
    %v2458 = vadd.f32 0.0, %v2457
    %v2459 = vpop.f32.mrb[0].mxu0
    %v2460 = vpop.f32.mrb[0].mxu0
    %v2461 = vadd.f32 0.0, %v2460
    %v2462 = vpop.f32.mrb[0].mxu0
    %2463 = vmatprep.mubr.bf16.mxu0 0
    %2464 = vmatmul.mubr.bf16.gmra.mrb[0].mxu0 %v2381
    %v2465 = vpop.f32.mrb[0].mxu0
    %v2466 = vadd.f32 0.0, %v2465
    %v2467 = vpop.f32.mrb[0].mxu0
    %v2468 = vpop.f32.mrb[0].mxu0
    %v2469 = vadd.f32 0.0, %v2468
    %v2470 = vpop.f32.mrb[0].mxu0
    %2471 = vmatprep.mubr.bf16.mxu0 0
    %2472 = vmatmul.mubr.bf16.gmra.mrb[0].mxu0 %v2382
    %v2473 = vpop.f32.mrb[0].mxu0
    %v2474 = vadd.f32 0.0, %v2473
    %v2475 = vpop.f32.mrb[0].mxu0
    %v2476 = vpop.f32.mrb[0].mxu0
    %v2477 = vadd.f32 0.0, %v2476
    %v2478 = vpop.f32.mrb[0].mxu0
    %2479 = vdwg.mxu0
    %2480 = vst [vmem:[#allocation11] sm:$0xff] %v2418
    %2481 = vst [vmem:[#allocation11 + $0x8] sm:$0xff] %v2421
    %2482 = vst [vmem:[#allocation11 + $0x10] sm:$0xff] %v2426
    %2483 = vst [vmem:[#allocation11 + $0x18] sm:$0xff] %v2429
    %2484 = vst [vmem:[#allocation11 + $0x20] sm:$0xff] %v2434
    %2485 = vst [vmem:[#allocation11 + $0x28] sm:$0xff] %v2437
    %2486 = vst [vmem:[#allocation11 + $0x30] sm:$0xff] %v2442
    %2487 = vst [vmem:[#allocation11 + $0x38] sm:$0xff] %v2445
    %2488 = vst [vmem:[#allocation11 + $0x40] sm:$0xff] %v2450
    %2489 = vst [vmem:[#allocation11 + $0x48] sm:$0xff] %v2453
    %2490 = vst [vmem:[#allocation11 + $0x50] sm:$0xff] %v2458
    %2491 = vst [vmem:[#allocation11 + $0x58] sm:$0xff] %v2461
    %2492 = vst [vmem:[#allocation11 + $0x60] sm:$0xff] %v2466
    %2493 = vst [vmem:[#allocation11 + $0x68] sm:$0xff] %v2469
    %2494 = vst [vmem:[#allocation11 + $0x70] sm:$0xff] %v2474
    %2495 = vst [vmem:[#allocation11 + $0x78] sm:$0xff] %v2477
    // Predicated region
    $region26: #{tpu_custom_call.1} parent=1 // pred_check
      _
    $region27: #{tpu_custom_call.1} parent=1 // pred_check_branch
      %2497 = sbr.rel (0) target = $region29
    $region28: #{tpu_custom_call.1} parent=1 // pred_region
      %s2499 = ssub.s32 2048, 2048
      %2500 = vsyncadd [#allocation4], %s2499
      %s2501 = sshll.u32 [#allocation8], 4
      %s2502 = int_to_ptr.vmem [resolvable:$true] %s2501
      %2507 = dma.vmem_to_hbm [thread:$0]  %s2502, 2048, %s3, [#allocation4], 128, 128, 8
    $region29: #{tpu_custom_call.1} parent=1 // pred_fallthru
      _
    // Predicated region
    $region30: #{tpu_custom_call.1} parent=1 // pred_check
      _
    $region31: #{tpu_custom_call.1} parent=1 // pred_check_branch
      %2509 = sbr.rel (0) target = $region33
    $region32: #{tpu_custom_call.1} parent=1 // pred_region
      %s2511 = ssub.s32 2048, 2048
      %2512 = vsyncadd [#allocation10], %s2511
      %s2513 = sshll.u32 [#allocation9], 4
      %s2514 = int_to_ptr.vmem [resolvable:$true] %s2513
      %2519 = dma.vmem_to_hbm [thread:$0]  %s2514, 2048, %s4, [#allocation10], 128, 128, 8
    $region33: #{tpu_custom_call.1} parent=1 // pred_fallthru
      _
    // Predicated region
    $region34: #{tpu_custom_call.1} parent=1 // pred_check
      _
    $region35: #{tpu_custom_call.1} parent=1 // pred_check_branch
      %2521 = sbr.rel (0) target = $region37
    $region36: #{tpu_custom_call.1} parent=1 // pred_region
      %s2523 = ssub.s32 2048, 2048
      %2524 = vsyncadd [#allocation10], %s2523
      %s2525 = sshll.u32 [#allocation11], 4
      %s2526 = int_to_ptr.vmem [resolvable:$true] %s2525
      %2531 = dma.vmem_to_hbm [thread:$0]  %s2526, 2048, %s5, [#allocation10], 128, 128, 8
    $region37: #{tpu_custom_call.1} parent=1 // pred_fallthru
      _
    // Predicated region
    $region38: #{tpu_custom_call.1} parent=1 // pred_check
      _
    $region39: #{tpu_custom_call.1} parent=1 // pred_check_branch
      %2533 = sbr.rel (0) target = $region41
    $region40: #{tpu_custom_call.1} parent=1 // pred_region
      %2534 = dma.done [#allocation4], 2048
    $region41: #{tpu_custom_call.1} parent=1 // pred_fallthru
      _
    // Predicated region
    $region42: #{tpu_custom_call.1} parent=1 // pred_check
      _
    $region43: #{tpu_custom_call.1} parent=1 // pred_check_branch
      %2536 = sbr.rel (0) target = $region45
    $region44: #{tpu_custom_call.1} parent=1 // pred_region
      %2537 = dma.done [#allocation10], 2048
    $region45: #{tpu_custom_call.1} parent=1 // pred_fallthru
      _
    // Predicated region
    $region46: #{tpu_custom_call.1} parent=1 // pred_check
      _
    $region47: #{tpu_custom_call.1} parent=1 // pred_check_branch
      %2539 = sbr.rel (0) target = $region49
    $region48: #{tpu_custom_call.1} parent=1 // pred_region
      %2540 = dma.done [#allocation10], 2048
    $region49: #{tpu_custom_call.1} parent=1 // pred_fallthru
      _
    %2541 = vsyncpa [#allocation3], 1
    %2542 = vsyncpa [#allocation6], 1
    %2543 = vsyncpa [#allocation4], 1
    %2544 = vsyncpa [#allocation10], 1

</llo_original>
